<compile_context>
chip_gen: v7x
topology: tpu7x:2x2x1
jax: 0.10.0
libtpu: 0.0.40
codegen_flags: <defaults>
</compile_context>

<pallas_src>
import jax
import jax.numpy as jnp
from jax.experimental import pallas as pl
from jax.experimental.pallas import tpu as pltpu

LANE = 128
TILE_B = 128  # MXU-aligned batch tile


def _round_up(x, m):
    return (x + m - 1) // m * m


# ---------------------------------------------------------------------------
# Mask construction (degrees logic from nflows MaskedLinear) -- plain JAX glue
# ---------------------------------------------------------------------------
def _get_input_degrees(in_features):
    return jnp.arange(1, in_features + 1, dtype=jnp.int32)


def _hidden_degrees(out_features, autoregressive_features):
    max_ = max(1, autoregressive_features - 1)
    min_ = min(1, autoregressive_features - 1)
    return jnp.arange(out_features, dtype=jnp.int32) % max_ + min_


def _hidden_mask(in_degrees, out_features, autoregressive_features):
    out_degrees = _hidden_degrees(out_features, autoregressive_features)
    mask = (out_degrees[:, None] >= in_degrees[None, :]).astype(jnp.float32)
    return mask, out_degrees


def _output_mask(in_degrees, out_features, autoregressive_features):
    reps = out_features // autoregressive_features
    out_degrees = jnp.tile(_get_input_degrees(autoregressive_features), reps)
    mask = (out_degrees[:, None] > in_degrees[None, :]).astype(jnp.float32)
    return mask, out_degrees


def _linear_init(key, out_features, in_features):
    kw, kb = jax.random.split(key)
    bound = 1.0 / jnp.sqrt(in_features)
    w = jax.random.uniform(kw, (out_features, in_features), jnp.float32, -bound, bound)
    b = jax.random.uniform(kb, (out_features,), jnp.float32, -bound, bound)
    return w, b


def build_made_raw(key, features, hidden_features, num_blocks=2, output_multiplier=1):
    """Raw [out, in] weights / masks / biases, mirroring the PyTorch module."""
    keys = jax.random.split(key, 2 + num_blocks)
    in_deg = _get_input_degrees(features)

    w0, b0 = _linear_init(keys[0], hidden_features, features)
    m0, deg = _hidden_mask(in_deg, hidden_features, features)

    blocks = []
    prev_deg = deg
    for blk in range(num_blocks):
        k0, k1 = jax.random.split(keys[1 + blk])
        wA, bA = _linear_init(k0, hidden_features, hidden_features)
        mA, degA = _hidden_mask(prev_deg, hidden_features, features)
        # second linear of residual block: zero_initialization=True -> U(-1e-3, 1e-3)
        kw, kb = jax.random.split(k1)
        wB = jax.random.uniform(kw, (hidden_features, hidden_features), jnp.float32, -1e-3, 1e-3)
        bB = jax.random.uniform(kb, (hidden_features,), jnp.float32, -1e-3, 1e-3)
        mB, degB = _hidden_mask(degA, hidden_features, features)
        prev_deg = degB
        blocks.append(((wA, mA, bA), (wB, mB, bB)))

    out_features = features * output_multiplier
    wf, bf = _linear_init(keys[-1], out_features, hidden_features)
    mf, _ = _output_mask(prev_deg, out_features, features)

    return dict(w0=w0, m0=m0, b0=b0, blocks=blocks, wf=wf, mf=mf, bf=bf,
                features=features, hidden=hidden_features, out_features=out_features)


# ---------------------------------------------------------------------------
# Host-side mask fusion + lane padding (+ bf16 cast of MXU operands)
# ---------------------------------------------------------------------------
def _pad2(a, rows, cols):
    out = jnp.zeros((rows, cols), a.dtype)
    return out.at[:a.shape[0], :a.shape[1]].set(a)


def fuse_and_pad(raw, weight_dtype=jnp.bfloat16):
    F = raw["features"]
    H = raw["hidden"]
    Fo = raw["out_features"]
    Fi_p = _round_up(F, LANE)
    H_p = _round_up(H, LANE)
    Fo_p = _round_up(Fo, LANE)

    # fused (mask applied) weights in [in, out] layout, zero padded to lane multiples
    w0 = _pad2((raw["w0"] * raw["m0"]).T, Fi_p, H_p)
    b0 = _pad2(raw["b0"][None, :], 1, H_p)

    wb_list, bb_list = [], []
    for (wA, mA, bA), (wB, mB, bB) in raw["blocks"]:
        wb_list.append(_pad2((wA * mA).T, H_p, H_p))
        bb_list.append(_pad2(bA[None, :], 1, H_p))
        wb_list.append(_pad2((wB * mB).T, H_p, H_p))
        bb_list.append(_pad2(bB[None, :], 1, H_p))
    wb = jnp.stack(wb_list)                      # [2*nb, H_p, H_p]
    bb = jnp.stack(bb_list)                      # [2*nb, 1, H_p]

    wf = _pad2((raw["wf"] * raw["mf"]).T, H_p, Fo_p)
    bf = _pad2(raw["bf"][None, :], 1, Fo_p)

    params = dict(w0=w0.astype(weight_dtype), b0=b0,
                  wb=wb.astype(weight_dtype), bb=bb,
                  wf=wf.astype(weight_dtype), bf=bf)
    dims = dict(F=F, Fo=Fo, Fi_p=Fi_p, H_p=H_p, Fo_p=Fo_p)
    return params, dims


# ---------------------------------------------------------------------------
# Pallas kernel: whole MADE forward on one batch tile
# ---------------------------------------------------------------------------
def made_kernel(x_ref, w0_ref, b0_ref, wb_ref, bb_ref, wf_ref, bf_ref, o_ref):
    cdt = w0_ref.dtype  # bf16 MXU operands, f32 accumulation / activations

    # initial masked linear: [TB, Fi_p] @ [Fi_p, H_p] -> [TB, H_p]
    h = jnp.dot(x_ref[...].astype(cdt), w0_ref[...],
                preferred_element_type=jnp.float32) + b0_ref[...]

    # residual blocks (ReLU -> linear -> ReLU -> linear -> add), unrolled
    num_blocks = wb_ref.shape[0] // 2
    for blk in range(num_blocks):
        t = jnp.maximum(h, 0.0)
        t = jnp.dot(t.astype(cdt), wb_ref[2 * blk],
                    preferred_element_type=jnp.float32) + bb_ref[2 * blk]
        t = jnp.maximum(t, 0.0)
        t = jnp.dot(t.astype(cdt), wb_ref[2 * blk + 1],
                    preferred_element_type=jnp.float32) + bb_ref[2 * blk + 1]
        h = h + t

    # final (output) masked linear: [TB, H_p] @ [H_p, Fo_p] -> [TB, Fo_p]
    o_ref[...] = (jnp.dot(h.astype(cdt), wf_ref[...],
                          preferred_element_type=jnp.float32)
                  + bf_ref[...]).astype(o_ref.dtype)


def made_forward(x, params, dims, tile_b=TILE_B):
    B, F = x.shape
    assert F == dims["F"]
    Fi_p, H_p, Fo_p, Fo = dims["Fi_p"], dims["H_p"], dims["Fo_p"], dims["Fo"]

    B_p = _round_up(max(B, 1), tile_b)
    x_p = jnp.zeros((B_p, Fi_p), jnp.float32).at[:B, :F].set(x.astype(jnp.float32))

    w0, b0, wb, bb, wf, bf = (params[k] for k in ("w0", "b0", "wb", "bb", "wf", "bf"))
    grid = (B_p // tile_b,)

    in_specs = [
        pl.BlockSpec((tile_b, Fi_p), lambda i: (i, 0)),          # x: moves with grid
        pl.BlockSpec(w0.shape, lambda i: (0, 0)),                # weights: resident
        pl.BlockSpec(b0.shape, lambda i: (0, 0)),
        pl.BlockSpec(wb.shape, lambda i: (0, 0, 0)),
        pl.BlockSpec(bb.shape, lambda i: (0, 0, 0)),
        pl.BlockSpec(wf.shape, lambda i: (0, 0)),
        pl.BlockSpec(bf.shape, lambda i: (0, 0)),
    ]
    out_specs = pl.BlockSpec((tile_b, Fo_p), lambda i: (i, 0))

    nb2 = int(wb.shape[0])
    flops = 2 * B_p * (Fi_p * H_p + nb2 * H_p * H_p + H_p * Fo_p)
    weight_bytes = sum(int(a.size) * a.dtype.itemsize for a in (w0, wb, wf))
    bias_bytes = sum(int(a.size) * a.dtype.itemsize for a in (b0, bb, bf))
    io_bytes = int(x_p.size) * 4 + B_p * Fo_p * 4
    cost = pl.CostEstimate(flops=flops, transcendentals=0,
                           bytes_accessed=weight_bytes + bias_bytes + io_bytes)

    # VMEM budget: resident weights + double-buffered x/out tiles + activations,
    # plus headroom; capped at 64 MiB so it is valid on v7x as well as v5e/v6e.
    tile_io_bytes = (tile_b * Fi_p + tile_b * Fo_p) * 4
    act_bytes = 3 * tile_b * H_p * 4
    needed = weight_bytes + bias_bytes + 2 * tile_io_bytes + act_bytes + (8 << 20)
    vmem_limit = int(min(64 * 1024 * 1024, max(needed, 16 * 1024 * 1024)))

    out_p = pl.pallas_call(
        made_kernel,
        out_shape=jax.ShapeDtypeStruct((B_p, Fo_p), jnp.float32),
        grid=grid,
        in_specs=in_specs,
        out_specs=out_specs,
        compiler_params=pltpu.CompilerParams(
            dimension_semantics=("parallel",),
            vmem_limit_bytes=vmem_limit),
        cost_estimate=cost,
    )(x_p, w0, b0, wb, bb, wf, bf)

    return out_p[:B, :Fo]


# ---------------------------------------------------------------------------
# Pure-JAX references
# ---------------------------------------------------------------------------
def made_forward_ref(x, params, dims):
    """Same fused/padded/bf16 math as the kernel (tight numerical match)."""
    F, Fo, Fi_p = dims["F"], dims["Fo"], dims["Fi_p"]
    cdt = params["w0"].dtype
    x_p = jnp.zeros((x.shape[0], Fi_p), jnp.float32).at[:, :F].set(x)
    h = jnp.dot(x_p.astype(cdt), params["w0"],
                preferred_element_type=jnp.float32) + params["b0"]
    nb = params["wb"].shape[0] // 2
    for blk in range(nb):
        t = jnp.maximum(h, 0.0)
        t = jnp.dot(t.astype(cdt), params["wb"][2 * blk],
                    preferred_element_type=jnp.float32) + params["bb"][2 * blk]
        t = jnp.maximum(t, 0.0)
        t = jnp.dot(t.astype(cdt), params["wb"][2 * blk + 1],
                    preferred_element_type=jnp.float32) + params["bb"][2 * blk + 1]
        h = h + t
    out = jnp.dot(h.astype(cdt), params["wf"],
                  preferred_element_type=jnp.float32) + params["bf"]
    return out[:, :Fo]


def made_forward_raw_f32(x, raw):
    """Unfused, unpadded f32 reference mirroring the PyTorch module exactly."""
    h = x @ (raw["w0"] * raw["m0"]).T + raw["b0"]
    for (wA, mA, bA), (wB, mB, bB) in raw["blocks"]:
        t = jnp.maximum(h, 0.0)
        t = t @ (wA * mA).T + bA
        t = jnp.maximum(t, 0.0)
        t = t @ (wB * mB).T + bB
        h = h + t
    return h @ (raw["wf"] * raw["mf"]).T + raw["bf"]


if __name__ == "__main__":
    features = 8
    hidden_features = 32
    num_blocks = 2
    output_multiplier = 1
    batch = 192  # two 128-row batch tiles (one padded) -> exercises the grid

    key = jax.random.PRNGKey(0)
    kx, kp = jax.random.split(key)
    x = jax.random.normal(kx, (batch, features), dtype=jnp.float32)

    raw = build_made_raw(kp, features, hidden_features, num_blocks, output_multiplier)
    params_bf16, dims = fuse_and_pad(raw, jnp.bfloat16)
    params_f32, _ = fuse_and_pad(raw, jnp.float32)

    # sanity: mask fusion + zero padding preserves the f32 math
    ref_raw = made_forward_raw_f32(x, raw)
    ref_fused_f32 = made_forward_ref(x, params_f32, dims)
    assert jnp.allclose(ref_raw, ref_fused_f32, atol=1e-5, rtol=1e-5)

    out = made_forward(x, params_bf16, dims)
    out = jax.block_until_ready(out)

    assert out.shape == (batch, features * output_multiplier)
    # tight check vs. identical bf16-weight math
    ref_bf16 = made_forward_ref(x, params_bf16, dims)
    assert jnp.allclose(out, ref_bf16, atol=1e-4, rtol=1e-4)
    # loose end-to-end check vs. full-f32 PyTorch-equivalent math (bf16 weight quantization)
    assert jnp.allclose(out, ref_raw, atol=1e-2)

    print("KERNEL_OK")
</pallas_src>

<mosaic_0001>
module attributes {stable_mosaic.version = 11 : i64} {
  func.func @made_kernel(%arg0: i32, %arg1: memref<128x128xf32, #tpu.memory_space<vmem>>, %arg2: memref<128x128xbf16, #tpu.memory_space<vmem>>, %arg3: memref<1x128xf32, #tpu.memory_space<vmem>>, %arg4: memref<4x128x128xbf16, #tpu.memory_space<vmem>>, %arg5: memref<4x1x128xf32, #tpu.memory_space<vmem>>, %arg6: memref<128x128xbf16, #tpu.memory_space<vmem>>, %arg7: memref<1x128xf32, #tpu.memory_space<vmem>>, %arg8: memref<128x128xf32, #tpu.memory_space<vmem>>) attributes {dimension_semantics = [#tpu.dimension_semantics<parallel>], iteration_bounds = array<i64: 2>, scalar_prefetch = 0 : i64, scratch_operands = 0 : i64, tpu.core_type = #tpu.core_type<tc>, window_params = [{transform_indices = @transform_0, window_bounds = array<i64: 128, 128>}, {pipeline_mode = #tpu.pipeline_mode<synchronous>, transform_indices = @transform_1, window_bounds = array<i64: 128, 128>}, {pipeline_mode = #tpu.pipeline_mode<synchronous>, transform_indices = @transform_2, window_bounds = array<i64: 1, 128>}, {pipeline_mode = #tpu.pipeline_mode<synchronous>, transform_indices = @transform_3, window_bounds = array<i64: 4, 128, 128>}, {pipeline_mode = #tpu.pipeline_mode<synchronous>, transform_indices = @transform_4, window_bounds = array<i64: 4, 1, 128>}, {pipeline_mode = #tpu.pipeline_mode<synchronous>, transform_indices = @transform_5, window_bounds = array<i64: 128, 128>}, {pipeline_mode = #tpu.pipeline_mode<synchronous>, transform_indices = @transform_6, window_bounds = array<i64: 1, 128>}, {transform_indices = @transform_7, window_bounds = array<i64: 128, 128>}]} {
    %c0 = arith.constant 0 : index
    %c0_0 = arith.constant 0 : index
    %0 = vector.load %arg1[%c0, %c0_0] : memref<128x128xf32, #tpu.memory_space<vmem>>, vector<128x128xf32>
    %1 = arith.truncf %0 : vector<128x128xf32> to vector<128x128xbf16>
    %c0_1 = arith.constant 0 : index
    %c0_2 = arith.constant 0 : index
    %2 = vector.load %arg2[%c0_1, %c0_2] : memref<128x128xbf16, #tpu.memory_space<vmem>>, vector<128x128xbf16>
    %cst = arith.constant dense<0.000000e+00> : vector<128x128xf32>
    %3 = tpu.matmul %1, %2, %cst {dimension_numbers = #tpu.dot_dimension_numbers<[1], [0], [0], [1], [0, 0, 1, 1], [], []>} : vector<128x128xbf16>, vector<128x128xbf16>, vector<128x128xf32> -> vector<128x128xf32>
    %c0_3 = arith.constant 0 : index
    %c0_4 = arith.constant 0 : index
    %4 = vector.load %arg3[%c0_3, %c0_4] : memref<1x128xf32, #tpu.memory_space<vmem>>, vector<1x128xf32>
    %5 = vector.broadcast %4 : vector<1x128xf32> to vector<128x128xf32>
    %6 = arith.addf %3, %5 : vector<128x128xf32>
    %cst_5 = arith.constant 0.000000e+00 : f32
    %7 = vector.broadcast %cst_5 : f32 to vector<128x128xf32>
    %8 = arith.maximumf %6, %7 : vector<128x128xf32>
    %9 = arith.truncf %8 : vector<128x128xf32> to vector<128x128xbf16>
    %c0_6 = arith.constant 0 : index
    %c0_7 = arith.constant 0 : index
    %c0_8 = arith.constant 0 : index
    %10 = vector.load %arg4[%c0_6, %c0_7, %c0_8] : memref<4x128x128xbf16, #tpu.memory_space<vmem>>, vector<1x128x128xbf16>
    %11 = vector.shape_cast %10 : vector<1x128x128xbf16> to vector<128x128xbf16>
    %cst_9 = arith.constant dense<0.000000e+00> : vector<128x128xf32>
    %12 = tpu.matmul %9, %11, %cst_9 {dimension_numbers = #tpu.dot_dimension_numbers<[1], [0], [0], [1], [0, 0, 1, 1], [], []>} : vector<128x128xbf16>, vector<128x128xbf16>, vector<128x128xf32> -> vector<128x128xf32>
    %c0_10 = arith.constant 0 : index
    %c0_11 = arith.constant 0 : index
    %c0_12 = arith.constant 0 : index
    %13 = vector.load %arg5[%c0_10, %c0_11, %c0_12] : memref<4x1x128xf32, #tpu.memory_space<vmem>>, vector<1x1x128xf32>
    %14 = vector.shape_cast %13 : vector<1x1x128xf32> to vector<1x128xf32>
    %15 = vector.broadcast %14 : vector<1x128xf32> to vector<128x128xf32>
    %16 = arith.addf %12, %15 : vector<128x128xf32>
    %cst_13 = arith.constant 0.000000e+00 : f32
    %17 = vector.broadcast %cst_13 : f32 to vector<128x128xf32>
    %18 = arith.maximumf %16, %17 : vector<128x128xf32>
    %19 = arith.truncf %18 : vector<128x128xf32> to vector<128x128xbf16>
    %c1 = arith.constant 1 : index
    %c0_14 = arith.constant 0 : index
    %c0_15 = arith.constant 0 : index
    %20 = vector.load %arg4[%c1, %c0_14, %c0_15] : memref<4x128x128xbf16, #tpu.memory_space<vmem>>, vector<1x128x128xbf16>
    %21 = vector.shape_cast %20 : vector<1x128x128xbf16> to vector<128x128xbf16>
    %cst_16 = arith.constant dense<0.000000e+00> : vector<128x128xf32>
    %22 = tpu.matmul %19, %21, %cst_16 {dimension_numbers = #tpu.dot_dimension_numbers<[1], [0], [0], [1], [0, 0, 1, 1], [], []>} : vector<128x128xbf16>, vector<128x128xbf16>, vector<128x128xf32> -> vector<128x128xf32>
    %c1_17 = arith.constant 1 : index
    %c0_18 = arith.constant 0 : index
    %c0_19 = arith.constant 0 : index
    %23 = vector.load %arg5[%c1_17, %c0_18, %c0_19] : memref<4x1x128xf32, #tpu.memory_space<vmem>>, vector<1x1x128xf32>
    %24 = vector.shape_cast %23 : vector<1x1x128xf32> to vector<1x128xf32>
    %25 = vector.broadcast %24 : vector<1x128xf32> to vector<128x128xf32>
    %26 = arith.addf %22, %25 : vector<128x128xf32>
    %27 = arith.addf %6, %26 : vector<128x128xf32>
    %cst_20 = arith.constant 0.000000e+00 : f32
    %28 = vector.broadcast %cst_20 : f32 to vector<128x128xf32>
    %29 = arith.maximumf %27, %28 : vector<128x128xf32>
    %30 = arith.truncf %29 : vector<128x128xf32> to vector<128x128xbf16>
    %c2 = arith.constant 2 : index
    %c0_21 = arith.constant 0 : index
    %c0_22 = arith.constant 0 : index
    %31 = vector.load %arg4[%c2, %c0_21, %c0_22] : memref<4x128x128xbf16, #tpu.memory_space<vmem>>, vector<1x128x128xbf16>
    %32 = vector.shape_cast %31 : vector<1x128x128xbf16> to vector<128x128xbf16>
    %cst_23 = arith.constant dense<0.000000e+00> : vector<128x128xf32>
    %33 = tpu.matmul %30, %32, %cst_23 {dimension_numbers = #tpu.dot_dimension_numbers<[1], [0], [0], [1], [0, 0, 1, 1], [], []>} : vector<128x128xbf16>, vector<128x128xbf16>, vector<128x128xf32> -> vector<128x128xf32>
    %c2_24 = arith.constant 2 : index
    %c0_25 = arith.constant 0 : index
    %c0_26 = arith.constant 0 : index
    %34 = vector.load %arg5[%c2_24, %c0_25, %c0_26] : memref<4x1x128xf32, #tpu.memory_space<vmem>>, vector<1x1x128xf32>
    %35 = vector.shape_cast %34 : vector<1x1x128xf32> to vector<1x128xf32>
    %36 = vector.broadcast %35 : vector<1x128xf32> to vector<128x128xf32>
    %37 = arith.addf %33, %36 : vector<128x128xf32>
    %cst_27 = arith.constant 0.000000e+00 : f32
    %38 = vector.broadcast %cst_27 : f32 to vector<128x128xf32>
    %39 = arith.maximumf %37, %38 : vector<128x128xf32>
    %40 = arith.truncf %39 : vector<128x128xf32> to vector<128x128xbf16>
    %c3 = arith.constant 3 : index
    %c0_28 = arith.constant 0 : index
    %c0_29 = arith.constant 0 : index
    %41 = vector.load %arg4[%c3, %c0_28, %c0_29] : memref<4x128x128xbf16, #tpu.memory_space<vmem>>, vector<1x128x128xbf16>
    %42 = vector.shape_cast %41 : vector<1x128x128xbf16> to vector<128x128xbf16>
    %cst_30 = arith.constant dense<0.000000e+00> : vector<128x128xf32>
    %43 = tpu.matmul %40, %42, %cst_30 {dimension_numbers = #tpu.dot_dimension_numbers<[1], [0], [0], [1], [0, 0, 1, 1], [], []>} : vector<128x128xbf16>, vector<128x128xbf16>, vector<128x128xf32> -> vector<128x128xf32>
    %c3_31 = arith.constant 3 : index
    %c0_32 = arith.constant 0 : index
    %c0_33 = arith.constant 0 : index
    %44 = vector.load %arg5[%c3_31, %c0_32, %c0_33] : memref<4x1x128xf32, #tpu.memory_space<vmem>>, vector<1x1x128xf32>
    %45 = vector.shape_cast %44 : vector<1x1x128xf32> to vector<1x128xf32>
    %46 = vector.broadcast %45 : vector<1x128xf32> to vector<128x128xf32>
    %47 = arith.addf %43, %46 : vector<128x128xf32>
    %48 = arith.addf %27, %47 : vector<128x128xf32>
    %49 = arith.truncf %48 : vector<128x128xf32> to vector<128x128xbf16>
    %c0_34 = arith.constant 0 : index
    %c0_35 = arith.constant 0 : index
    %50 = vector.load %arg6[%c0_34, %c0_35] : memref<128x128xbf16, #tpu.memory_space<vmem>>, vector<128x128xbf16>
    %cst_36 = arith.constant dense<0.000000e+00> : vector<128x128xf32>
    %51 = tpu.matmul %49, %50, %cst_36 {dimension_numbers = #tpu.dot_dimension_numbers<[1], [0], [0], [1], [0, 0, 1, 1], [], []>} : vector<128x128xbf16>, vector<128x128xbf16>, vector<128x128xf32> -> vector<128x128xf32>
    %c0_37 = arith.constant 0 : index
    %c0_38 = arith.constant 0 : index
    %52 = vector.load %arg7[%c0_37, %c0_38] : memref<1x128xf32, #tpu.memory_space<vmem>>, vector<1x128xf32>
    %53 = vector.broadcast %52 : vector<1x128xf32> to vector<128x128xf32>
    %54 = arith.addf %51, %53 : vector<128x128xf32>
    %c0_39 = arith.constant 0 : index
    %c0_40 = arith.constant 0 : index
    %55 = vector.load %arg8[%c0_39, %c0_40] : memref<128x128xf32, #tpu.memory_space<vmem>>, vector<128x128xf32>
    tpu.vector_store %arg8[%c0_39, %c0_40], %54 {strides = array<i32>} : memref<128x128xf32, #tpu.memory_space<vmem>>, vector<128x128xf32>,
    return
  }
  func.func @transform_0(%arg0: i32) -> (i32, i32) {
    %c0_i32 = arith.constant 0 : i32
    %c0_i32_0 = arith.constant 0 : i32
    return %arg0, %c0_i32 : i32, i32
  }
  func.func @transform_1(%arg0: i32) -> (i32, i32) {
    %c0_i32 = arith.constant 0 : i32
    %c0_i32_0 = arith.constant 0 : i32
    %c0_i32_1 = arith.constant 0 : i32
    return %c0_i32, %c0_i32_0 : i32, i32
  }
  func.func @transform_2(%arg0: i32) -> (i32, i32) {
    %c0_i32 = arith.constant 0 : i32
    %c0_i32_0 = arith.constant 0 : i32
    %c0_i32_1 = arith.constant 0 : i32
    return %c0_i32, %c0_i32_0 : i32, i32
  }
  func.func @transform_3(%arg0: i32) -> (i32, i32, i32) {
    %c0_i32 = arith.constant 0 : i32
    %c0_i32_0 = arith.constant 0 : i32
    %c0_i32_1 = arith.constant 0 : i32
    %c0_i32_2 = arith.constant 0 : i32
    return %c0_i32, %c0_i32_0, %c0_i32_1 : i32, i32, i32
  }
  func.func @transform_4(%arg0: i32) -> (i32, i32, i32) {
    %c0_i32 = arith.constant 0 : i32
    %c0_i32_0 = arith.constant 0 : i32
    %c0_i32_1 = arith.constant 0 : i32
    %c0_i32_2 = arith.constant 0 : i32
    return %c0_i32, %c0_i32_0, %c0_i32_1 : i32, i32, i32
  }
  func.func @transform_5(%arg0: i32) -> (i32, i32) {
    %c0_i32 = arith.constant 0 : i32
    %c0_i32_0 = arith.constant 0 : i32
    %c0_i32_1 = arith.constant 0 : i32
    return %c0_i32, %c0_i32_0 : i32, i32
  }
  func.func @transform_6(%arg0: i32) -> (i32, i32) {
    %c0_i32 = arith.constant 0 : i32
    %c0_i32_0 = arith.constant 0 : i32
    %c0_i32_1 = arith.constant 0 : i32
    return %c0_i32, %c0_i32_0 : i32, i32
  }
  func.func @transform_7(%arg0: i32) -> (i32, i32) {
    %c0_i32 = arith.constant 0 : i32
    %c0_i32_0 = arith.constant 0 : i32
    return %arg0, %c0_i32 : i32, i32
  }
}

</mosaic_0001>

<llo_original>
// kernel: tpu_custom_call.1
$region0: #{tpu_custom_call.1}
  #allocation0 [shape = 'u32[]', space=smem, size = 0x4, offset = 0x4, fixed_abs, tag = 'smem constant byte address 0x4 - core index']
  #allocation1 [shape = 'u32[144,128]{1,0:T(1,128)}', space=vmem, size = 0x12000, scoped, tag = 'internal scratch']
  %s0 = inlined_call_operand.hbm [shape: f32[256,128], index: 0, kind: input, shape index: {}]
  %s1 = inlined_call_operand.hbm [shape: bf16[128,128], index: 1, kind: input, shape index: {}]
  %s2 = inlined_call_operand.vmem [shape: f32[1,128], index: 2, kind: input, shape index: {}]
  %s3 = inlined_call_operand.hbm [shape: bf16[4,128,128], index: 3, kind: input, shape index: {}]
  %s4 = inlined_call_operand.vmem [shape: f32[4,1,128], index: 4, kind: input, shape index: {}]
  %s5 = inlined_call_operand.hbm [shape: bf16[128,128], index: 5, kind: input, shape index: {}]
  %s6 = inlined_call_operand.vmem [shape: f32[1,128], index: 6, kind: input, shape index: {}]
  %s7 = inlined_call_operand.hbm [shape: f32[256,128], index: 7, kind: output, shape index: {}]
  %s8 = sld [smem:[#allocation0]]
  $region77: #{tpu_custom_call.1} parent=0
    _
  %s10 = ssub.s32 1, %s8
  %s11 = scalar_select 0, %s10, %s8
  $region1: #{tpu_custom_call.1} parent=0
    #allocation2 [shape = 'u8[131072]{0}', space=vmem, size = 0x20000, scoped, tag = 'input window, operand 0']
    #allocation3 [shape = 's32[2]{0}', space=sflag, size = 0x8, scoped, tag = 'scoped memory for tpu_custom_call.1']
    #allocation4 [shape = 's32[2]{0}', space=sflag, size = 0x8, scoped, tag = 'scoped memory for tpu_custom_call.1']
    #allocation5 [shape = 'u8[32768]{0}', space=vmem, size = 0x8000, scoped, tag = 'input window, operand 1, single buffered']
    #allocation6 [shape = 's32[1]{0}', space=sflag, size = 0x4, scoped, tag = 'scoped memory for tpu_custom_call.1']
    #allocation7 [shape = 'u8[131072]{0}', space=vmem, size = 0x20000, scoped, tag = 'input window, operand 3, single buffered']
    #allocation8 [shape = 'u8[32768]{0}', space=vmem, size = 0x8000, scoped, tag = 'input window, operand 5, single buffered']
    #allocation9 [shape = 's32[1]{0}', space=sflag, size = 0x4, scoped, tag = 'scoped memory for tpu_custom_call.1']
    #allocation10 [shape = 'u8[131072]{0}', space=vmem, size = 0x20000, scoped, tag = 'output window, operand 0']
    %12 = vsyncpa [#allocation3], 0
    %s13 = scalar_lea.sflag [#allocation3], 1
    %14 = vsyncpa %s13, 0
    %15 = vsyncpa [#allocation6], 0
    %16 = vsyncpa [#allocation9], 0
    %17 = vsyncpa [#allocation4], 0
    %s18 = scalar_lea.sflag [#allocation4], 1
    %19 = vsyncpa %s18, 0
    loop: start=0, step=1, limit=4
    $region2: #{tpu_custom_call.1} parent=1 // loop_pre_header
      _
    $region3: #{tpu_custom_call.1} parent=1 // loop_header
      %s21 = sphi 0, %s25
      %p22 = scmp.ge.s32.totalorder %s21, 4
      %s31 = sphi 0, %s33
      %s34 = sphi 0, %s31
      %s35 = sphi 0, %s34
      %s51 = sphi 0, %s35
      %s55 = sphi 0, %s55
      %s57 = sphi 0, %s55
      %s58 = sphi 0, %s57
      %s72 = sphi 0, %s58
      %s76 = sphi 0, %s76
      %s78 = sphi 0, %s76
      %s79 = sphi 0, %s78
      %s93 = sphi 0, %s79
      %s97 = sphi 0, %s97
      %s99 = sphi 0, %s97
      %s100 = sphi 0, %s99
      %s114 = sphi 0, %s100
      %s118 = sphi 0, %s118
      %s120 = sphi 0, %s118
      %s121 = sphi 0, %s120
      %s135 = sphi 0, %s121
      %s139 = sphi 0, %s139
      %s141 = sphi 0, %s139
      %s142 = sphi 0, %s141
      %s156 = sphi 0, %s142
      %s160 = sphi 0, %s160
      %s162 = sphi 0, %s160
      %s163 = sphi 0, %s162
      %s177 = sphi 0, %s163
      %s183 = sphi 0, %s185
      %s186 = sphi 0, %s183
      %s187 = sphi 0, %s186
      %s203 = sphi 0, %s187
    $region4: #{tpu_custom_call.1} parent=1 // loop_header_branch
      %24 = sbr.rel (%p22) target = $region8
    $region5: #{tpu_custom_call.1} parent=1 // loop_body
      %s26 = ssub.s32 %s21, 1
      %s27 = ssub.s32 %s21, 2
      %s28 = sadd.s32 %s21, 1
      %s29 = ssub.s32 %s21, %s28
      %p30 = scmp.eq.s32.totalorder %s29, 0
      %s32 = sadd.s32 %s31, 1
      %s33 = scalar_select %p30, %s31, %s32
      %p36 = pneg %p30
      %p37 = scmp.eq.s32.totalorder %s21, 1
      %p38 = por %p36, %p37
      %p39 = scmp.ne.s32.totalorder %s31, %s34
      %p40 = scmp.eq.s32.totalorder %s21, 0
      %p41 = por %p39, %p40
      %p42 = scmp.ne.s32.totalorder %s31, %s34
      %p43 = scmp.eq.s32.totalorder %s26, 1
      %p44 = por %p42, %p43
      %p45 = scmp.ne.s32.totalorder %s34, %s35
      %p46 = scmp.eq.s32.totalorder %s26, 0
      %p47 = por %p45, %p46
      %p48 = scmp.ne.s32.totalorder %s34, %s35
      %p49 = scmp.eq.s32.totalorder %s27, 1
      %p50 = por %p48, %p49
      %p52 = scmp.ne.s32.totalorder %s35, %s51
      %p53 = scmp.eq.s32.totalorder %s27, 0
      %p54 = por %p52, %p53
      %s56 = sadd.s32 %s55, 1
      %p59 = scmp.eq.s32.totalorder %s21, 1
      %p60 = scmp.ne.s32.totalorder %s55, %s57
      %p61 = scmp.eq.s32.totalorder %s21, 0
      %p62 = por %p60, %p61
      %p63 = scmp.ne.s32.totalorder %s55, %s57
      %p64 = scmp.eq.s32.totalorder %s26, 1
      %p65 = por %p63, %p64
      %p66 = scmp.ne.s32.totalorder %s57, %s58
      %p67 = scmp.eq.s32.totalorder %s26, 0
      %p68 = por %p66, %p67
      %p69 = scmp.ne.s32.totalorder %s57, %s58
      %p70 = scmp.eq.s32.totalorder %s27, 1
      %p71 = por %p69, %p70
      %p73 = scmp.ne.s32.totalorder %s58, %s72
      %p74 = scmp.eq.s32.totalorder %s27, 0
      %p75 = por %p73, %p74
      %s77 = sadd.s32 %s76, 1
      %p80 = scmp.eq.s32.totalorder %s21, 1
      %p81 = scmp.ne.s32.totalorder %s76, %s78
      %p82 = scmp.eq.s32.totalorder %s21, 0
      %p83 = por %p81, %p82
      %p84 = scmp.ne.s32.totalorder %s76, %s78
      %p85 = scmp.eq.s32.totalorder %s26, 1
      %p86 = por %p84, %p85
      %p87 = scmp.ne.s32.totalorder %s78, %s79
      %p88 = scmp.eq.s32.totalorder %s26, 0
      %p89 = por %p87, %p88
      %p90 = scmp.ne.s32.totalorder %s78, %s79
      %p91 = scmp.eq.s32.totalorder %s27, 1
      %p92 = por %p90, %p91
      %p94 = scmp.ne.s32.totalorder %s79, %s93
      %p95 = scmp.eq.s32.totalorder %s27, 0
      %p96 = por %p94, %p95
      %s98 = sadd.s32 %s97, 1
      %p101 = scmp.eq.s32.totalorder %s21, 1
      %p102 = scmp.ne.s32.totalorder %s97, %s99
      %p103 = scmp.eq.s32.totalorder %s21, 0
      %p104 = por %p102, %p103
      %p105 = scmp.ne.s32.totalorder %s97, %s99
      %p106 = scmp.eq.s32.totalorder %s26, 1
      %p107 = por %p105, %p106
      %p108 = scmp.ne.s32.totalorder %s99, %s100
      %p109 = scmp.eq.s32.totalorder %s26, 0
      %p110 = por %p108, %p109
      %p111 = scmp.ne.s32.totalorder %s99, %s100
      %p112 = scmp.eq.s32.totalorder %s27, 1
      %p113 = por %p111, %p112
      %p115 = scmp.ne.s32.totalorder %s100, %s114
      %p116 = scmp.eq.s32.totalorder %s27, 0
      %p117 = por %p115, %p116
      %s119 = sadd.s32 %s118, 1
      %p122 = scmp.eq.s32.totalorder %s21, 1
      %p123 = scmp.ne.s32.totalorder %s118, %s120
      %p124 = scmp.eq.s32.totalorder %s21, 0
      %p125 = por %p123, %p124
      %p126 = scmp.ne.s32.totalorder %s118, %s120
      %p127 = scmp.eq.s32.totalorder %s26, 1
      %p128 = por %p126, %p127
      %p129 = scmp.ne.s32.totalorder %s120, %s121
      %p130 = scmp.eq.s32.totalorder %s26, 0
      %p131 = por %p129, %p130
      %p132 = scmp.ne.s32.totalorder %s120, %s121
      %p133 = scmp.eq.s32.totalorder %s27, 1
      %p134 = por %p132, %p133
      %p136 = scmp.ne.s32.totalorder %s121, %s135
      %p137 = scmp.eq.s32.totalorder %s27, 0
      %p138 = por %p136, %p137
      %s140 = sadd.s32 %s139, 1
      %p143 = scmp.eq.s32.totalorder %s21, 1
      %p144 = scmp.ne.s32.totalorder %s139, %s141
      %p145 = scmp.eq.s32.totalorder %s21, 0
      %p146 = por %p144, %p145
      %p147 = scmp.ne.s32.totalorder %s139, %s141
      %p148 = scmp.eq.s32.totalorder %s26, 1
      %p149 = por %p147, %p148
      %p150 = scmp.ne.s32.totalorder %s141, %s142
      %p151 = scmp.eq.s32.totalorder %s26, 0
      %p152 = por %p150, %p151
      %p153 = scmp.ne.s32.totalorder %s141, %s142
      %p154 = scmp.eq.s32.totalorder %s27, 1
      %p155 = por %p153, %p154
      %p157 = scmp.ne.s32.totalorder %s142, %s156
      %p158 = scmp.eq.s32.totalorder %s27, 0
      %p159 = por %p157, %p158
      %s161 = sadd.s32 %s160, 1
      %p164 = scmp.eq.s32.totalorder %s21, 1
      %p165 = scmp.ne.s32.totalorder %s160, %s162
      %p166 = scmp.eq.s32.totalorder %s21, 0
      %p167 = por %p165, %p166
      %p168 = scmp.ne.s32.totalorder %s160, %s162
      %p169 = scmp.eq.s32.totalorder %s26, 1
      %p170 = por %p168, %p169
      %p171 = scmp.ne.s32.totalorder %s162, %s163
      %p172 = scmp.eq.s32.totalorder %s26, 0
      %p173 = por %p171, %p172
      %p174 = scmp.ne.s32.totalorder %s162, %s163
      %p175 = scmp.eq.s32.totalorder %s27, 1
      %p176 = por %p174, %p175
      %p178 = scmp.ne.s32.totalorder %s163, %s177
      %p179 = scmp.eq.s32.totalorder %s27, 0
      %p180 = por %p178, %p179
      %s181 = ssub.s32 %s21, %s28
      %p182 = scmp.eq.s32.totalorder %s181, 0
      %s184 = sadd.s32 %s183, 1
      %s185 = scalar_select %p182, %s183, %s184
      %p188 = pneg %p182
      %p189 = scmp.eq.s32.totalorder %s21, 1
      %p190 = por %p188, %p189
      %p191 = scmp.ne.s32.totalorder %s183, %s186
      %p192 = scmp.eq.s32.totalorder %s21, 0
      %p193 = por %p191, %p192
      %p194 = scmp.ne.s32.totalorder %s183, %s186
      %p195 = scmp.eq.s32.totalorder %s26, 1
      %p196 = por %p194, %p195
      %p197 = scmp.ne.s32.totalorder %s186, %s187
      %p198 = scmp.eq.s32.totalorder %s26, 0
      %p199 = por %p197, %p198
      %p200 = scmp.ne.s32.totalorder %s186, %s187
      %p201 = scmp.eq.s32.totalorder %s27, 1
      %p202 = por %p200, %p201
      %p204 = scmp.ne.s32.totalorder %s187, %s203
      %p205 = scmp.eq.s32.totalorder %s27, 0
      %p206 = por %p204, %p205
      %p207 = scmp.le.s32.totalorder 1, %s21
      %p208 = scmp.lt.s32.totalorder %s21, 3
      %p209 = pnand %p207, %p208
      %p210 = pneg %p209
      // Predicated region
      $region9: #{tpu_custom_call.1} parent=5 // pred_check
        _
      $region10: #{tpu_custom_call.1} parent=5 // pred_check_branch
        %212 = sbr.rel (%p209) target = $region12
      $region11: #{tpu_custom_call.1} parent=5 // pred_region
        %s213 = ssub.s32 %s21, 1
        // Predicated region
        $region13: #{tpu_custom_call.1} parent=11 // pred_check
          %p214 = pneg %p68
        $region14: #{tpu_custom_call.1} parent=11 // pred_check_branch
          %216 = sbr.rel (%p214) target = $region16
        $region15: #{tpu_custom_call.1} parent=11 // pred_region
          %s218 = ssub.s32 1024, 1024
          %219 = vsyncadd [#allocation6], %s218
          %s220 = sshll.u32 [#allocation5], 4
          %s221 = int_to_ptr.vmem [resolvable:$true] %s220
          %226 = dma.hbm_to_vmem [thread:$0]  %s1, 1024, %s221, [#allocation6], 64, 64, 4
        $region16: #{tpu_custom_call.1} parent=11 // pred_fallthru
          _
        // Predicated region
        $region17: #{tpu_custom_call.1} parent=11 // pred_check
          %p227 = pneg %p89
        $region18: #{tpu_custom_call.1} parent=11 // pred_check_branch
          %229 = sbr.rel (%p227) target = $region20
        $region19: #{tpu_custom_call.1} parent=11 // pred_region
          _
        $region20: #{tpu_custom_call.1} parent=11 // pred_fallthru
          _
        // Predicated region
        $region21: #{tpu_custom_call.1} parent=11 // pred_check
          %p230 = pneg %p110
        $region22: #{tpu_custom_call.1} parent=11 // pred_check_branch
          %232 = sbr.rel (%p230) target = $region24
        $region23: #{tpu_custom_call.1} parent=11 // pred_region
          %s234 = ssub.s32 4096, 4096
          %235 = vsyncadd [#allocation6], %s234
          %s236 = sshll.u32 [#allocation7], 4
          %s237 = int_to_ptr.vmem [resolvable:$true] %s236
          %242 = dma.hbm_to_vmem [thread:$0]  %s3, 4096, %s237, [#allocation6], 64, 64, 4
        $region24: #{tpu_custom_call.1} parent=11 // pred_fallthru
          _
        // Predicated region
        $region25: #{tpu_custom_call.1} parent=11 // pred_check
          %p243 = pneg %p131
        $region26: #{tpu_custom_call.1} parent=11 // pred_check_branch
          %245 = sbr.rel (%p243) target = $region28
        $region27: #{tpu_custom_call.1} parent=11 // pred_region
          _
        $region28: #{tpu_custom_call.1} parent=11 // pred_fallthru
          _
        // Predicated region
        $region29: #{tpu_custom_call.1} parent=11 // pred_check
          %p246 = pneg %p152
        $region30: #{tpu_custom_call.1} parent=11 // pred_check_branch
          %248 = sbr.rel (%p246) target = $region32
        $region31: #{tpu_custom_call.1} parent=11 // pred_region
          %s250 = ssub.s32 1024, 1024
          %251 = vsyncadd [#allocation9], %s250
          %s252 = sshll.u32 [#allocation8], 4
          %s253 = int_to_ptr.vmem [resolvable:$true] %s252
          %258 = dma.hbm_to_vmem [thread:$0]  %s5, 1024, %s253, [#allocation9], 64, 64, 4
        $region32: #{tpu_custom_call.1} parent=11 // pred_fallthru
          _
        // Predicated region
        $region33: #{tpu_custom_call.1} parent=11 // pred_check
          %p259 = pneg %p173
        $region34: #{tpu_custom_call.1} parent=11 // pred_check_branch
          %261 = sbr.rel (%p259) target = $region36
        $region35: #{tpu_custom_call.1} parent=11 // pred_region
          _
        $region36: #{tpu_custom_call.1} parent=11 // pred_fallthru
          _
      $region12: #{tpu_custom_call.1} parent=5 // pred_fallthru
        _
      %p262 = scmp.lt.s32.totalorder %s21, 2
      // Predicated region
      $region37: #{tpu_custom_call.1} parent=5 // pred_check
        %p263 = pneg %p262
      $region38: #{tpu_custom_call.1} parent=5 // pred_check_branch
        %265 = sbr.rel (%p263) target = $region40
      $region39: #{tpu_custom_call.1} parent=5 // pred_region
        // Predicated region
        $region41: #{tpu_custom_call.1} parent=39 // pred_check
          %p266 = pneg %p41
        $region42: #{tpu_custom_call.1} parent=39 // pred_check_branch
          %268 = sbr.rel (%p266) target = $region44
        $region43: #{tpu_custom_call.1} parent=39 // pred_region
          %s269 = sand.u32 %s31, 1
          %s270 = scalar_lea.sflag [#allocation3], %s269
          %s271 = sand.u32 %s31, 1
          %s272 = smul.addr %s271, 128
          %s273 = scalar_lea.vmem [#allocation2], %s272
          %s274 = smul.u32 16, %s21
          %s276 = ssub.s32 2048, 2048
          %277 = vsyncadd %s270, %s276
          %s278 = smul.addr %s274, 128
          %s279 = scalar_lea.hbm %s0, %s278
          %s280 = sshll.u32 %s273, 4
          %s281 = int_to_ptr.vmem [resolvable:$true] %s280
          %286 = dma.hbm_to_vmem [thread:$0]  %s279, 2048, %s281, %s270, 128, 128, 8
        $region44: #{tpu_custom_call.1} parent=39 // pred_fallthru
          _
      $region40: #{tpu_custom_call.1} parent=5 // pred_fallthru
        _
      %p287 = scmp.le.s32.totalorder 1, %s21
      %p288 = scmp.lt.s32.totalorder %s21, 3
      %p289 = pnand %p287, %p288
      %p290 = pneg %p289
      // Predicated region
      $region45: #{tpu_custom_call.1} parent=5 // pred_check
        _
      $region46: #{tpu_custom_call.1} parent=5 // pred_check_branch
        %292 = sbr.rel (%p289) target = $region48
      $region47: #{tpu_custom_call.1} parent=5 // pred_region
        %s293 = ssub.s32 %s21, 1
        %s294 = sand.u32 %s34, 1
        %s295 = scalar_lea.sflag [#allocation3], %s294
        %s296 = sand.u32 %s34, 1
        %s297 = smul.addr %s296, 128
        %s298 = scalar_lea.vmem [#allocation2], %s297
        // Predicated region
        $region49: #{tpu_custom_call.1} parent=47 // pred_check
          %p299 = pneg %p47
        $region50: #{tpu_custom_call.1} parent=47 // pred_check_branch
          %301 = sbr.rel (%p299) target = $region52
        $region51: #{tpu_custom_call.1} parent=47 // pred_region
          %302 = dma.done %s295, 2048
        $region52: #{tpu_custom_call.1} parent=47 // pred_fallthru
          _
        // Predicated region
        $region53: #{tpu_custom_call.1} parent=47 // pred_check
          %p303 = pneg %p68
        $region54: #{tpu_custom_call.1} parent=47 // pred_check_branch
          %305 = sbr.rel (%p303) target = $region56
        $region55: #{tpu_custom_call.1} parent=47 // pred_region
          %306 = dma.done [#allocation6], 1024
        $region56: #{tpu_custom_call.1} parent=47 // pred_fallthru
          _
        // Predicated region
        $region57: #{tpu_custom_call.1} parent=47 // pred_check
          %p307 = pneg %p110
        $region58: #{tpu_custom_call.1} parent=47 // pred_check_branch
          %309 = sbr.rel (%p307) target = $region60
        $region59: #{tpu_custom_call.1} parent=47 // pred_region
          %310 = dma.done [#allocation6], 4096
        $region60: #{tpu_custom_call.1} parent=47 // pred_fallthru
          _
        // Predicated region
        $region61: #{tpu_custom_call.1} parent=47 // pred_check
          %p311 = pneg %p152
        $region62: #{tpu_custom_call.1} parent=47 // pred_check_branch
          %313 = sbr.rel (%p311) target = $region64
        $region63: #{tpu_custom_call.1} parent=47 // pred_region
          %314 = dma.done [#allocation9], 1024
        $region64: #{tpu_custom_call.1} parent=47 // pred_fallthru
          _
        %s315 = sand.u32 %s34, 1
        %s316 = scalar_lea.sflag [#allocation3], %s315
        %s317 = sand.u32 %s34, 1
        %s318 = smul.addr %s317, 128
        %s319 = scalar_lea.vmem [#allocation2], %s318
        %p320 = pneg %p47
        %p321 = pneg %p44
        %p322 = pneg %p68
        %p323 = pneg %p65
        %p324 = pneg %p89
        %p325 = pneg %p86
        %p326 = pneg %p110
        %p327 = pneg %p107
        %p328 = pneg %p131
        %p329 = pneg %p128
        %p330 = pneg %p152
        %p331 = pneg %p149
        %p332 = pneg %p173
        %p333 = pneg %p170
        %p334 = pneg %p199
        %p335 = pneg %p196
        %s336 = sand.u32 %s186, 1
        %s337 = scalar_lea.sflag [#allocation4], %s336
        %s338 = sand.u32 %s186, 1
        %s339 = smul.addr %s338, 128
        %s340 = scalar_lea.vmem [#allocation10], %s339
        %s341 = smul.u32 16, %s26
        %s342 = smul.u32 16, %s26
        %v344 = vld [vmem:[%s298] sm:$0xff]
        %v345 = vld [vmem:[%s298 + $0x8] sm:$0xff]
        %v346 = vld [vmem:[%s298 + $0x10] sm:$0xff]
        %v347 = vld [vmem:[%s298 + $0x18] sm:$0xff]
        %v348 = vld [vmem:[%s298 + $0x20] sm:$0xff]
        %v349 = vld [vmem:[%s298 + $0x28] sm:$0xff]
        %v350 = vld [vmem:[%s298 + $0x30] sm:$0xff]
        %v351 = vld [vmem:[%s298 + $0x38] sm:$0xff]
        %v352 = vld [vmem:[%s298 + $0x40] sm:$0xff]
        %v353 = vld [vmem:[%s298 + $0x48] sm:$0xff]
        %v354 = vld [vmem:[%s298 + $0x50] sm:$0xff]
        %v355 = vld [vmem:[%s298 + $0x58] sm:$0xff]
        %v356 = vld [vmem:[%s298 + $0x60] sm:$0xff]
        %v357 = vld [vmem:[%s298 + $0x68] sm:$0xff]
        %v358 = vld [vmem:[%s298 + $0x70] sm:$0xff]
        %v359 = vld [vmem:[%s298 + $0x78] sm:$0xff]
        %v360 = vpack.c.bf16 %v345, %v344
        %v361 = vpack.c.bf16 %v347, %v346
        %v362 = vpack.c.bf16 %v349, %v348
        %v363 = vpack.c.bf16 %v351, %v350
        %v364 = vpack.c.bf16 %v353, %v352
        %v365 = vpack.c.bf16 %v355, %v354
        %v366 = vpack.c.bf16 %v357, %v356
        %v367 = vpack.c.bf16 %v359, %v358
        %v368 = vld [vmem:[#allocation5] sm:$0xf]
        %v369 = vld [vmem:[#allocation5 + $0x4] sm:$0xf]
        %v370 = vld [vmem:[#allocation5 + $0x8] sm:$0xf]
        %v371 = vld [vmem:[#allocation5 + $0xc] sm:$0xf]
        %v372 = vld [vmem:[#allocation5 + $0x10] sm:$0xf]
        %v373 = vld [vmem:[#allocation5 + $0x14] sm:$0xf]
        %v374 = vld [vmem:[#allocation5 + $0x18] sm:$0xf]
        %v375 = vld [vmem:[#allocation5 + $0x1c] sm:$0xf]
        %v376 = vld [vmem:[#allocation5 + $0x20] sm:$0xf]
        %v377 = vld [vmem:[#allocation5 + $0x24] sm:$0xf]
        %v378 = vld [vmem:[#allocation5 + $0x28] sm:$0xf]
        %v379 = vld [vmem:[#allocation5 + $0x2c] sm:$0xf]
        %v380 = vld [vmem:[#allocation5 + $0x30] sm:$0xf]
        %v381 = vld [vmem:[#allocation5 + $0x34] sm:$0xf]
        %v382 = vld [vmem:[#allocation5 + $0x38] sm:$0xf]
        %v383 = vld [vmem:[#allocation5 + $0x3c] sm:$0xf]
        %v384 = vld [vmem:[%s2] sm:$0x1]
        %v386 = vlaneseq
        %v387 = vshrl.u32 %v386, 7
        %v388 = vsub.s32 0, %v387
        %v389 = vrot.slane %v384, %v388
        %v407 = vunpack.c.l.b16 %v368
        %v408 = vunpack.c.l.b16 %v369
        %v409 = vunpack.c.l.b16 %v370
        %v410 = vunpack.c.l.b16 %v371
        %v411 = vunpack.c.l.b16 %v372
        %v412 = vunpack.c.l.b16 %v373
        %v413 = vunpack.c.l.b16 %v374
        %v414 = vunpack.c.l.b16 %v375
        %v415 = vunpack.c.l.b16 %v376
        %v416 = vunpack.c.l.b16 %v377
        %v417 = vunpack.c.l.b16 %v378
        %v418 = vunpack.c.l.b16 %v379
        %v419 = vunpack.c.l.b16 %v380
        %v420 = vunpack.c.l.b16 %v381
        %v421 = vunpack.c.l.b16 %v382
        %v422 = vunpack.c.l.b16 %v383
        %v423 = vpack.c.b16 %v408, %v407
        %v424 = vpack.c.b16 %v410, %v409
        %v425 = vpack.c.b16 %v412, %v411
        %v426 = vpack.c.b16 %v414, %v413
        %v427 = vpack.c.b16 %v416, %v415
        %v428 = vpack.c.b16 %v418, %v417
        %v429 = vpack.c.b16 %v420, %v419
        %v430 = vpack.c.b16 %v422, %v421
        %439 = vmatprep.subr.bf16.mxu0 0
        %440 = vmatpush1.bf16.msra.mxu0 %v423
        %441 = vmatprep.subr.bf16.mxu0 0
        %442 = vmatpush1.bf16.msra.mxu0 %v424
        %443 = vmatprep.subr.bf16.mxu0 0
        %444 = vmatpush1.bf16.msra.mxu0 %v425
        %445 = vmatprep.subr.bf16.mxu0 0
        %446 = vmatpush1.bf16.msra.mxu0 %v426
        %447 = vmatprep.subr.bf16.mxu0 0
        %448 = vmatpush1.bf16.msra.mxu0 %v427
        %449 = vmatprep.subr.bf16.mxu0 0
        %450 = vmatpush1.bf16.msra.mxu0 %v428
        %451 = vmatprep.subr.bf16.mxu0 0
        %452 = vmatpush1.bf16.msra.mxu0 %v429
        %453 = vmatprep.subr.bf16.mxu0 0
        %454 = vmatpush1.bf16.msra.mxu0 %v430
        %455 = vmatprep.subr.bf16.mxu0 0
        %456 = vmatpush1.bf16.msra.mxu0 0
        %457 = vmatprep.subr.bf16.mxu0 0
        %458 = vmatpush1.bf16.msra.mxu0 0
        %459 = vmatprep.subr.bf16.mxu0 0
        %460 = vmatpush1.bf16.msra.mxu0 0
        %461 = vmatprep.subr.bf16.mxu0 0
        %462 = vmatpush1.bf16.msra.mxu0 0
        %463 = vmatprep.subr.bf16.mxu0 0
        %464 = vmatpush1.bf16.msra.mxu0 0
        %465 = vmatprep.subr.bf16.mxu0 0
        %466 = vmatpush1.bf16.msra.mxu0 0
        %467 = vmatprep.subr.bf16.mxu0 0
        %468 = vmatpush1.bf16.msra.mxu0 0
        %469 = vmatprep.subr.bf16.mxu0 0
        %470 = vmatpush1.bf16.msra.mxu0 0
        %471 = vmatprep.mubr.bf16.mxu0 0
        %472 = vmatmul.mubr.bf16.gmra.mrb[0].mxu0 %v360
        %v473 = vpop.f32.mrb[0].mxu0
        %v474 = vadd.f32 %v389, %v473
        %v475 = vpop.f32.mrb[0].mxu0
        %v476 = vpop.f32.mrb[0].mxu0
        %v477 = vadd.f32 %v389, %v476
        %v478 = vpop.f32.mrb[0].mxu0
        %479 = vmatprep.mubr.bf16.mxu0 0
        %480 = vmatmul.mubr.bf16.gmra.mrb[0].mxu0 %v361
        %v481 = vpop.f32.mrb[0].mxu0
        %v482 = vadd.f32 %v389, %v481
        %v483 = vpop.f32.mrb[0].mxu0
        %v484 = vpop.f32.mrb[0].mxu0
        %v485 = vadd.f32 %v389, %v484
        %v486 = vpop.f32.mrb[0].mxu0
        %487 = vmatprep.mubr.bf16.mxu0 0
        %488 = vmatmul.mubr.bf16.gmra.mrb[0].mxu0 %v362
        %v489 = vpop.f32.mrb[0].mxu0
        %v490 = vadd.f32 %v389, %v489
        %v491 = vpop.f32.mrb[0].mxu0
        %v492 = vpop.f32.mrb[0].mxu0
        %v493 = vadd.f32 %v389, %v492
        %v494 = vpop.f32.mrb[0].mxu0
        %495 = vmatprep.mubr.bf16.mxu0 0
        %496 = vmatmul.mubr.bf16.gmra.mrb[0].mxu0 %v363
        %v497 = vpop.f32.mrb[0].mxu0
        %v498 = vadd.f32 %v389, %v497
        %v499 = vpop.f32.mrb[0].mxu0
        %v500 = vpop.f32.mrb[0].mxu0
        %v501 = vadd.f32 %v389, %v500
        %v502 = vpop.f32.mrb[0].mxu0
        %503 = vmatprep.mubr.bf16.mxu0 0
        %504 = vmatmul.mubr.bf16.gmra.mrb[0].mxu0 %v364
        %v505 = vpop.f32.mrb[0].mxu0
        %v506 = vadd.f32 %v389, %v505
        %v507 = vpop.f32.mrb[0].mxu0
        %v508 = vpop.f32.mrb[0].mxu0
        %v509 = vadd.f32 %v389, %v508
        %v510 = vpop.f32.mrb[0].mxu0
        %511 = vmatprep.mubr.bf16.mxu0 0
        %512 = vmatmul.mubr.bf16.gmra.mrb[0].mxu0 %v365
        %v513 = vpop.f32.mrb[0].mxu0
        %v514 = vadd.f32 %v389, %v513
        %v515 = vpop.f32.mrb[0].mxu0
        %v516 = vpop.f32.mrb[0].mxu0
        %v517 = vadd.f32 %v389, %v516
        %v518 = vpop.f32.mrb[0].mxu0
        %519 = vmatprep.mubr.bf16.mxu0 0
        %520 = vmatmul.mubr.bf16.gmra.mrb[0].mxu0 %v366
        %v521 = vpop.f32.mrb[0].mxu0
        %v522 = vadd.f32 %v389, %v521
        %v523 = vpop.f32.mrb[0].mxu0
        %v524 = vpop.f32.mrb[0].mxu0
        %v525 = vadd.f32 %v389, %v524
        %v526 = vpop.f32.mrb[0].mxu0
        %527 = vmatprep.mubr.bf16.mxu0 0
        %528 = vmatmul.mubr.bf16.gmra.mrb[0].mxu0 %v367
        %v529 = vpop.f32.mrb[0].mxu0
        %v530 = vadd.f32 %v389, %v529
        %v531 = vpop.f32.mrb[0].mxu0
        %v532 = vpop.f32.mrb[0].mxu0
        %v533 = vadd.f32 %v389, %v532
        %v534 = vpop.f32.mrb[0].mxu0
        %535 = vdwg.mxu0
        %v536 = vmax.f32 %v474, 0.0
        %v537 = vmax.f32 %v477, 0.0
        %v538 = vmax.f32 %v482, 0.0
        %v539 = vmax.f32 %v485, 0.0
        %v540 = vmax.f32 %v490, 0.0
        %v541 = vmax.f32 %v493, 0.0
        %v542 = vmax.f32 %v498, 0.0
        %v543 = vmax.f32 %v501, 0.0
        %v544 = vmax.f32 %v506, 0.0
        %v545 = vmax.f32 %v509, 0.0
        %v546 = vmax.f32 %v514, 0.0
        %v547 = vmax.f32 %v517, 0.0
        %v548 = vmax.f32 %v522, 0.0
        %v549 = vmax.f32 %v525, 0.0
        %v550 = vmax.f32 %v530, 0.0
        %v551 = vmax.f32 %v533, 0.0
        %v552 = vpack.c.bf16 %v537, %v536
        %v553 = vpack.c.bf16 %v539, %v538
        %v554 = vpack.c.bf16 %v541, %v540
        %v555 = vpack.c.bf16 %v543, %v542
        %v556 = vpack.c.bf16 %v545, %v544
        %v557 = vpack.c.bf16 %v547, %v546
        %v558 = vpack.c.bf16 %v549, %v548
        %v559 = vpack.c.bf16 %v551, %v550
        %v560 = vld [vmem:[#allocation7] sm:$0xf]
        %v561 = vld [vmem:[#allocation7 + $0x4] sm:$0xf]
        %v562 = vld [vmem:[#allocation7 + $0x8] sm:$0xf]
        %v563 = vld [vmem:[#allocation7 + $0xc] sm:$0xf]
        %v564 = vld [vmem:[#allocation7 + $0x10] sm:$0xf]
        %v565 = vld [vmem:[#allocation7 + $0x14] sm:$0xf]
        %v566 = vld [vmem:[#allocation7 + $0x18] sm:$0xf]
        %v567 = vld [vmem:[#allocation7 + $0x1c] sm:$0xf]
        %v568 = vld [vmem:[#allocation7 + $0x20] sm:$0xf]
        %v569 = vld [vmem:[#allocation7 + $0x24] sm:$0xf]
        %v570 = vld [vmem:[#allocation7 + $0x28] sm:$0xf]
        %v571 = vld [vmem:[#allocation7 + $0x2c] sm:$0xf]
        %v572 = vld [vmem:[#allocation7 + $0x30] sm:$0xf]
        %v573 = vld [vmem:[#allocation7 + $0x34] sm:$0xf]
        %v574 = vld [vmem:[#allocation7 + $0x38] sm:$0xf]
        %v575 = vld [vmem:[#allocation7 + $0x3c] sm:$0xf]
        %v576 = vld [vmem:[%s4] sm:$0x1]
        %v578 = vlaneseq
        %v579 = vshrl.u32 %v578, 7
        %v580 = vsub.s32 0, %v579
        %v581 = vrot.slane %v576, %v580
        %v599 = vunpack.c.l.b16 %v560
        %v600 = vunpack.c.l.b16 %v561
        %v601 = vunpack.c.l.b16 %v562
        %v602 = vunpack.c.l.b16 %v563
        %v603 = vunpack.c.l.b16 %v564
        %v604 = vunpack.c.l.b16 %v565
        %v605 = vunpack.c.l.b16 %v566
        %v606 = vunpack.c.l.b16 %v567
        %v607 = vunpack.c.l.b16 %v568
        %v608 = vunpack.c.l.b16 %v569
        %v609 = vunpack.c.l.b16 %v570
        %v610 = vunpack.c.l.b16 %v571
        %v611 = vunpack.c.l.b16 %v572
        %v612 = vunpack.c.l.b16 %v573
        %v613 = vunpack.c.l.b16 %v574
        %v614 = vunpack.c.l.b16 %v575
        %v615 = vpack.c.b16 %v600, %v599
        %v616 = vpack.c.b16 %v602, %v601
        %v617 = vpack.c.b16 %v604, %v603
        %v618 = vpack.c.b16 %v606, %v605
        %v619 = vpack.c.b16 %v608, %v607
        %v620 = vpack.c.b16 %v610, %v609
        %v621 = vpack.c.b16 %v612, %v611
        %v622 = vpack.c.b16 %v614, %v613
        %631 = vmatprep.subr.bf16.mxu0 0
        %632 = vmatpush1.bf16.msra.mxu0 %v615
        %633 = vmatprep.subr.bf16.mxu0 0
        %634 = vmatpush1.bf16.msra.mxu0 %v616
        %635 = vmatprep.subr.bf16.mxu0 0
        %636 = vmatpush1.bf16.msra.mxu0 %v617
        %637 = vmatprep.subr.bf16.mxu0 0
        %638 = vmatpush1.bf16.msra.mxu0 %v618
        %639 = vmatprep.subr.bf16.mxu0 0
        %640 = vmatpush1.bf16.msra.mxu0 %v619
        %641 = vmatprep.subr.bf16.mxu0 0
        %642 = vmatpush1.bf16.msra.mxu0 %v620
        %643 = vmatprep.subr.bf16.mxu0 0
        %644 = vmatpush1.bf16.msra.mxu0 %v621
        %645 = vmatprep.subr.bf16.mxu0 0
        %646 = vmatpush1.bf16.msra.mxu0 %v622
        %647 = vmatprep.subr.bf16.mxu0 0
        %648 = vmatpush1.bf16.msra.mxu0 0
        %649 = vmatprep.subr.bf16.mxu0 0
        %650 = vmatpush1.bf16.msra.mxu0 0
        %651 = vmatprep.subr.bf16.mxu0 0
        %652 = vmatpush1.bf16.msra.mxu0 0
        %653 = vmatprep.subr.bf16.mxu0 0
        %654 = vmatpush1.bf16.msra.mxu0 0
        %655 = vmatprep.subr.bf16.mxu0 0
        %656 = vmatpush1.bf16.msra.mxu0 0
        %657 = vmatprep.subr.bf16.mxu0 0
        %658 = vmatpush1.bf16.msra.mxu0 0
        %659 = vmatprep.subr.bf16.mxu0 0
        %660 = vmatpush1.bf16.msra.mxu0 0
        %661 = vmatprep.subr.bf16.mxu0 0
        %662 = vmatpush1.bf16.msra.mxu0 0
        %663 = vmatprep.mubr.bf16.mxu0 0
        %664 = vmatmul.mubr.bf16.gmra.mrb[0].mxu0 %v552
        %v665 = vpop.f32.mrb[0].mxu0
        %v666 = vadd.f32 %v581, %v665
        %v667 = vpop.f32.mrb[0].mxu0
        %v668 = vpop.f32.mrb[0].mxu0
        %v669 = vadd.f32 %v581, %v668
        %v670 = vpop.f32.mrb[0].mxu0
        %671 = vmatprep.mubr.bf16.mxu0 0
        %672 = vmatmul.mubr.bf16.gmra.mrb[0].mxu0 %v553
        %v673 = vpop.f32.mrb[0].mxu0
        %v674 = vadd.f32 %v581, %v673
        %v675 = vpop.f32.mrb[0].mxu0
        %v676 = vpop.f32.mrb[0].mxu0
        %v677 = vadd.f32 %v581, %v676
        %v678 = vpop.f32.mrb[0].mxu0
        %679 = vmatprep.mubr.bf16.mxu0 0
        %680 = vmatmul.mubr.bf16.gmra.mrb[0].mxu0 %v554
        %v681 = vpop.f32.mrb[0].mxu0
        %v682 = vadd.f32 %v581, %v681
        %v683 = vpop.f32.mrb[0].mxu0
        %v684 = vpop.f32.mrb[0].mxu0
        %v685 = vadd.f32 %v581, %v684
        %v686 = vpop.f32.mrb[0].mxu0
        %687 = vmatprep.mubr.bf16.mxu0 0
        %688 = vmatmul.mubr.bf16.gmra.mrb[0].mxu0 %v555
        %v689 = vpop.f32.mrb[0].mxu0
        %v690 = vadd.f32 %v581, %v689
        %v691 = vpop.f32.mrb[0].mxu0
        %v692 = vpop.f32.mrb[0].mxu0
        %v693 = vadd.f32 %v581, %v692
        %v694 = vpop.f32.mrb[0].mxu0
        %695 = vmatprep.mubr.bf16.mxu0 0
        %696 = vmatmul.mubr.bf16.gmra.mrb[0].mxu0 %v556
        %v697 = vpop.f32.mrb[0].mxu0
        %v698 = vadd.f32 %v581, %v697
        %v699 = vpop.f32.mrb[0].mxu0
        %v700 = vpop.f32.mrb[0].mxu0
        %v701 = vadd.f32 %v581, %v700
        %v702 = vpop.f32.mrb[0].mxu0
        %703 = vmatprep.mubr.bf16.mxu0 0
        %704 = vmatmul.mubr.bf16.gmra.mrb[0].mxu0 %v557
        %v705 = vpop.f32.mrb[0].mxu0
        %v706 = vadd.f32 %v581, %v705
        %v707 = vpop.f32.mrb[0].mxu0
        %v708 = vpop.f32.mrb[0].mxu0
        %v709 = vadd.f32 %v581, %v708
        %v710 = vpop.f32.mrb[0].mxu0
        %711 = vmatprep.mubr.bf16.mxu0 0
        %712 = vmatmul.mubr.bf16.gmra.mrb[0].mxu0 %v558
        %v713 = vpop.f32.mrb[0].mxu0
        %v714 = vadd.f32 %v581, %v713
        %v715 = vpop.f32.mrb[0].mxu0
        %v716 = vpop.f32.mrb[0].mxu0
        %v717 = vadd.f32 %v581, %v716
        %v718 = vpop.f32.mrb[0].mxu0
        %719 = vmatprep.mubr.bf16.mxu0 0
        %720 = vmatmul.mubr.bf16.gmra.mrb[0].mxu0 %v559
        %v721 = vpop.f32.mrb[0].mxu0
        %v722 = vadd.f32 %v581, %v721
        %v723 = vpop.f32.mrb[0].mxu0
        %v724 = vpop.f32.mrb[0].mxu0
        %v725 = vadd.f32 %v581, %v724
        %v726 = vpop.f32.mrb[0].mxu0
        %727 = vdwg.mxu0
        %v728 = vmax.f32 %v666, 0.0
        %v729 = vmax.f32 %v669, 0.0
        %v730 = vmax.f32 %v674, 0.0
        %v731 = vmax.f32 %v677, 0.0
        %v732 = vmax.f32 %v682, 0.0
        %v733 = vmax.f32 %v685, 0.0
        %v734 = vmax.f32 %v690, 0.0
        %v735 = vmax.f32 %v693, 0.0
        %v736 = vmax.f32 %v698, 0.0
        %v737 = vmax.f32 %v701, 0.0
        %v738 = vmax.f32 %v706, 0.0
        %v739 = vmax.f32 %v709, 0.0
        %v740 = vmax.f32 %v714, 0.0
        %v741 = vmax.f32 %v717, 0.0
        %v742 = vmax.f32 %v722, 0.0
        %v743 = vmax.f32 %v725, 0.0
        %v744 = vpack.c.bf16 %v729, %v728
        %v745 = vpack.c.bf16 %v731, %v730
        %v746 = vpack.c.bf16 %v733, %v732
        %v747 = vpack.c.bf16 %v735, %v734
        %v748 = vpack.c.bf16 %v737, %v736
        %v749 = vpack.c.bf16 %v739, %v738
        %v750 = vpack.c.bf16 %v741, %v740
        %v751 = vpack.c.bf16 %v743, %v742
        %s752 = scalar_lea.vmem [#allocation7], 64
        %v753 = vld [vmem:[%s752] sm:$0xf]
        %v754 = vld [vmem:[%s752 + $0x4] sm:$0xf]
        %v755 = vld [vmem:[%s752 + $0x8] sm:$0xf]
        %v756 = vld [vmem:[%s752 + $0xc] sm:$0xf]
        %v757 = vld [vmem:[%s752 + $0x10] sm:$0xf]
        %v758 = vld [vmem:[%s752 + $0x14] sm:$0xf]
        %v759 = vld [vmem:[%s752 + $0x18] sm:$0xf]
        %v760 = vld [vmem:[%s752 + $0x1c] sm:$0xf]
        %v761 = vld [vmem:[%s752 + $0x20] sm:$0xf]
        %v762 = vld [vmem:[%s752 + $0x24] sm:$0xf]
        %v763 = vld [vmem:[%s752 + $0x28] sm:$0xf]
        %v764 = vld [vmem:[%s752 + $0x2c] sm:$0xf]
        %v765 = vld [vmem:[%s752 + $0x30] sm:$0xf]
        %v766 = vld [vmem:[%s752 + $0x34] sm:$0xf]
        %v767 = vld [vmem:[%s752 + $0x38] sm:$0xf]
        %v768 = vld [vmem:[%s752 + $0x3c] sm:$0xf]
        %s769 = scalar_lea.vmem %s4, 1
        %v770 = vld [vmem:[%s769] sm:$0x1]
        %v772 = vlaneseq
        %v773 = vshrl.u32 %v772, 7
        %v774 = vsub.s32 0, %v773
        %v775 = vrot.slane %v770, %v774
        %v793 = vunpack.c.l.b16 %v753
        %v794 = vunpack.c.l.b16 %v754
        %v795 = vunpack.c.l.b16 %v755
        %v796 = vunpack.c.l.b16 %v756
        %v797 = vunpack.c.l.b16 %v757
        %v798 = vunpack.c.l.b16 %v758
        %v799 = vunpack.c.l.b16 %v759
        %v800 = vunpack.c.l.b16 %v760
        %v801 = vunpack.c.l.b16 %v761
        %v802 = vunpack.c.l.b16 %v762
        %v803 = vunpack.c.l.b16 %v763
        %v804 = vunpack.c.l.b16 %v764
        %v805 = vunpack.c.l.b16 %v765
        %v806 = vunpack.c.l.b16 %v766
        %v807 = vunpack.c.l.b16 %v767
        %v808 = vunpack.c.l.b16 %v768
        %v809 = vpack.c.b16 %v794, %v793
        %v810 = vpack.c.b16 %v796, %v795
        %v811 = vpack.c.b16 %v798, %v797
        %v812 = vpack.c.b16 %v800, %v799
        %v813 = vpack.c.b16 %v802, %v801
        %v814 = vpack.c.b16 %v804, %v803
        %v815 = vpack.c.b16 %v806, %v805
        %v816 = vpack.c.b16 %v808, %v807
        %825 = vmatprep.subr.bf16.mxu0 0
        %826 = vmatpush1.bf16.msra.mxu0 %v809
        %827 = vmatprep.subr.bf16.mxu0 0
        %828 = vmatpush1.bf16.msra.mxu0 %v810
        %829 = vmatprep.subr.bf16.mxu0 0
        %830 = vmatpush1.bf16.msra.mxu0 %v811
        %831 = vmatprep.subr.bf16.mxu0 0
        %832 = vmatpush1.bf16.msra.mxu0 %v812
        %833 = vmatprep.subr.bf16.mxu0 0
        %834 = vmatpush1.bf16.msra.mxu0 %v813
        %835 = vmatprep.subr.bf16.mxu0 0
        %836 = vmatpush1.bf16.msra.mxu0 %v814
        %837 = vmatprep.subr.bf16.mxu0 0
        %838 = vmatpush1.bf16.msra.mxu0 %v815
        %839 = vmatprep.subr.bf16.mxu0 0
        %840 = vmatpush1.bf16.msra.mxu0 %v816
        %841 = vmatprep.subr.bf16.mxu0 0
        %842 = vmatpush1.bf16.msra.mxu0 0
        %843 = vmatprep.subr.bf16.mxu0 0
        %844 = vmatpush1.bf16.msra.mxu0 0
        %845 = vmatprep.subr.bf16.mxu0 0
        %846 = vmatpush1.bf16.msra.mxu0 0
        %847 = vmatprep.subr.bf16.mxu0 0
        %848 = vmatpush1.bf16.msra.mxu0 0
        %849 = vmatprep.subr.bf16.mxu0 0
        %850 = vmatpush1.bf16.msra.mxu0 0
        %851 = vmatprep.subr.bf16.mxu0 0
        %852 = vmatpush1.bf16.msra.mxu0 0
        %853 = vmatprep.subr.bf16.mxu0 0
        %854 = vmatpush1.bf16.msra.mxu0 0
        %855 = vmatprep.subr.bf16.mxu0 0
        %856 = vmatpush1.bf16.msra.mxu0 0
        %857 = vmatprep.mubr.bf16.mxu0 0
        %858 = vmatmul.mubr.bf16.gmra.mrb[0].mxu0 %v744
        %v859 = vpop.f32.mrb[0].mxu0
        %v860 = vadd.f32 %v775, %v859
        %v861 = vpop.f32.mrb[0].mxu0
        %v862 = vpop.f32.mrb[0].mxu0
        %v863 = vadd.f32 %v775, %v862
        %v864 = vpop.f32.mrb[0].mxu0
        %865 = vmatprep.mubr.bf16.mxu0 0
        %866 = vmatmul.mubr.bf16.gmra.mrb[0].mxu0 %v745
        %v867 = vpop.f32.mrb[0].mxu0
        %v868 = vadd.f32 %v775, %v867
        %v869 = vpop.f32.mrb[0].mxu0
        %v870 = vpop.f32.mrb[0].mxu0
        %v871 = vadd.f32 %v775, %v870
        %v872 = vpop.f32.mrb[0].mxu0
        %873 = vmatprep.mubr.bf16.mxu0 0
        %874 = vmatmul.mubr.bf16.gmra.mrb[0].mxu0 %v746
        %v875 = vpop.f32.mrb[0].mxu0
        %v876 = vadd.f32 %v775, %v875
        %v877 = vpop.f32.mrb[0].mxu0
        %v878 = vpop.f32.mrb[0].mxu0
        %v879 = vadd.f32 %v775, %v878
        %v880 = vpop.f32.mrb[0].mxu0
        %881 = vmatprep.mubr.bf16.mxu0 0
        %882 = vmatmul.mubr.bf16.gmra.mrb[0].mxu0 %v747
        %v883 = vpop.f32.mrb[0].mxu0
        %v884 = vadd.f32 %v775, %v883
        %v885 = vpop.f32.mrb[0].mxu0
        %v886 = vpop.f32.mrb[0].mxu0
        %v887 = vadd.f32 %v775, %v886
        %v888 = vpop.f32.mrb[0].mxu0
        %889 = vmatprep.mubr.bf16.mxu0 0
        %890 = vmatmul.mubr.bf16.gmra.mrb[0].mxu0 %v748
        %v891 = vpop.f32.mrb[0].mxu0
        %v892 = vadd.f32 %v775, %v891
        %v893 = vpop.f32.mrb[0].mxu0
        %v894 = vpop.f32.mrb[0].mxu0
        %v895 = vadd.f32 %v775, %v894
        %v896 = vpop.f32.mrb[0].mxu0
        %897 = vmatprep.mubr.bf16.mxu0 0
        %898 = vmatmul.mubr.bf16.gmra.mrb[0].mxu0 %v749
        %v899 = vpop.f32.mrb[0].mxu0
        %v900 = vadd.f32 %v775, %v899
        %v901 = vpop.f32.mrb[0].mxu0
        %v902 = vpop.f32.mrb[0].mxu0
        %v903 = vadd.f32 %v775, %v902
        %v904 = vpop.f32.mrb[0].mxu0
        %905 = vmatprep.mubr.bf16.mxu0 0
        %906 = vmatmul.mubr.bf16.gmra.mrb[0].mxu0 %v750
        %v907 = vpop.f32.mrb[0].mxu0
        %v908 = vadd.f32 %v775, %v907
        %v909 = vpop.f32.mrb[0].mxu0
        %v910 = vpop.f32.mrb[0].mxu0
        %v911 = vadd.f32 %v775, %v910
        %v912 = vpop.f32.mrb[0].mxu0
        %913 = vmatprep.mubr.bf16.mxu0 0
        %914 = vmatmul.mubr.bf16.gmra.mrb[0].mxu0 %v751
        %v915 = vpop.f32.mrb[0].mxu0
        %v916 = vadd.f32 %v775, %v915
        %v917 = vpop.f32.mrb[0].mxu0
        %v918 = vpop.f32.mrb[0].mxu0
        %v919 = vadd.f32 %v775, %v918
        %v920 = vpop.f32.mrb[0].mxu0
        %921 = vdwg.mxu0
        %v922 = vadd.f32 %v474, %v860
        %v923 = vadd.f32 %v477, %v863
        %v924 = vadd.f32 %v482, %v868
        %v925 = vadd.f32 %v485, %v871
        %v926 = vadd.f32 %v490, %v876
        %v927 = vadd.f32 %v493, %v879
        %v928 = vadd.f32 %v498, %v884
        %v929 = vadd.f32 %v501, %v887
        %v930 = vadd.f32 %v506, %v892
        %v931 = vadd.f32 %v509, %v895
        %v932 = vadd.f32 %v514, %v900
        %v933 = vadd.f32 %v517, %v903
        %v934 = vadd.f32 %v522, %v908
        %v935 = vadd.f32 %v525, %v911
        %v936 = vadd.f32 %v530, %v916
        %v937 = vadd.f32 %v533, %v919
        %v938 = vmax.f32 %v922, 0.0
        %v939 = vmax.f32 %v923, 0.0
        %v940 = vmax.f32 %v924, 0.0
        %v941 = vmax.f32 %v925, 0.0
        %v942 = vmax.f32 %v926, 0.0
        %v943 = vmax.f32 %v927, 0.0
        %v944 = vmax.f32 %v928, 0.0
        %v945 = vmax.f32 %v929, 0.0
        %v946 = vmax.f32 %v930, 0.0
        %v947 = vmax.f32 %v931, 0.0
        %v948 = vmax.f32 %v932, 0.0
        %v949 = vmax.f32 %v933, 0.0
        %v950 = vmax.f32 %v934, 0.0
        %v951 = vmax.f32 %v935, 0.0
        %v952 = vmax.f32 %v936, 0.0
        %v953 = vmax.f32 %v937, 0.0
        %v954 = vpack.c.bf16 %v939, %v938
        %v955 = vpack.c.bf16 %v941, %v940
        %v956 = vpack.c.bf16 %v943, %v942
        %v957 = vpack.c.bf16 %v945, %v944
        %v958 = vpack.c.bf16 %v947, %v946
        %v959 = vpack.c.bf16 %v949, %v948
        %v960 = vpack.c.bf16 %v951, %v950
        %v961 = vpack.c.bf16 %v953, %v952
        %s962 = scalar_lea.vmem [#allocation7], 128
        %v963 = vld [vmem:[%s962] sm:$0xf]
        %v964 = vld [vmem:[%s962 + $0x4] sm:$0xf]
        %v965 = vld [vmem:[%s962 + $0x8] sm:$0xf]
        %v966 = vld [vmem:[%s962 + $0xc] sm:$0xf]
        %v967 = vld [vmem:[%s962 + $0x10] sm:$0xf]
        %v968 = vld [vmem:[%s962 + $0x14] sm:$0xf]
        %v969 = vld [vmem:[%s962 + $0x18] sm:$0xf]
        %v970 = vld [vmem:[%s962 + $0x1c] sm:$0xf]
        %v971 = vld [vmem:[%s962 + $0x20] sm:$0xf]
        %v972 = vld [vmem:[%s962 + $0x24] sm:$0xf]
        %v973 = vld [vmem:[%s962 + $0x28] sm:$0xf]
        %v974 = vld [vmem:[%s962 + $0x2c] sm:$0xf]
        %v975 = vld [vmem:[%s962 + $0x30] sm:$0xf]
        %v976 = vld [vmem:[%s962 + $0x34] sm:$0xf]
        %v977 = vld [vmem:[%s962 + $0x38] sm:$0xf]
        %v978 = vld [vmem:[%s962 + $0x3c] sm:$0xf]
        %s979 = scalar_lea.vmem %s4, 2
        %v980 = vld [vmem:[%s979] sm:$0x1]
        %v982 = vlaneseq
        %v983 = vshrl.u32 %v982, 7
        %v984 = vsub.s32 0, %v983
        %v985 = vrot.slane %v980, %v984
        %v1003 = vunpack.c.l.b16 %v963
        %v1004 = vunpack.c.l.b16 %v964
        %v1005 = vunpack.c.l.b16 %v965
        %v1006 = vunpack.c.l.b16 %v966
        %v1007 = vunpack.c.l.b16 %v967
        %v1008 = vunpack.c.l.b16 %v968
        %v1009 = vunpack.c.l.b16 %v969
        %v1010 = vunpack.c.l.b16 %v970
        %v1011 = vunpack.c.l.b16 %v971
        %v1012 = vunpack.c.l.b16 %v972
        %v1013 = vunpack.c.l.b16 %v973
        %v1014 = vunpack.c.l.b16 %v974
        %v1015 = vunpack.c.l.b16 %v975
        %v1016 = vunpack.c.l.b16 %v976
        %v1017 = vunpack.c.l.b16 %v977
        %v1018 = vunpack.c.l.b16 %v978
        %v1019 = vpack.c.b16 %v1004, %v1003
        %v1020 = vpack.c.b16 %v1006, %v1005
        %v1021 = vpack.c.b16 %v1008, %v1007
        %v1022 = vpack.c.b16 %v1010, %v1009
        %v1023 = vpack.c.b16 %v1012, %v1011
        %v1024 = vpack.c.b16 %v1014, %v1013
        %v1025 = vpack.c.b16 %v1016, %v1015
        %v1026 = vpack.c.b16 %v1018, %v1017
        %1035 = vmatprep.subr.bf16.mxu0 0
        %1036 = vmatpush1.bf16.msra.mxu0 %v1019
        %1037 = vmatprep.subr.bf16.mxu0 0
        %1038 = vmatpush1.bf16.msra.mxu0 %v1020
        %1039 = vmatprep.subr.bf16.mxu0 0
        %1040 = vmatpush1.bf16.msra.mxu0 %v1021
        %1041 = vmatprep.subr.bf16.mxu0 0
        %1042 = vmatpush1.bf16.msra.mxu0 %v1022
        %1043 = vmatprep.subr.bf16.mxu0 0
        %1044 = vmatpush1.bf16.msra.mxu0 %v1023
        %1045 = vmatprep.subr.bf16.mxu0 0
        %1046 = vmatpush1.bf16.msra.mxu0 %v1024
        %1047 = vmatprep.subr.bf16.mxu0 0
        %1048 = vmatpush1.bf16.msra.mxu0 %v1025
        %1049 = vmatprep.subr.bf16.mxu0 0
        %1050 = vmatpush1.bf16.msra.mxu0 %v1026
        %1051 = vmatprep.subr.bf16.mxu0 0
        %1052 = vmatpush1.bf16.msra.mxu0 0
        %1053 = vmatprep.subr.bf16.mxu0 0
        %1054 = vmatpush1.bf16.msra.mxu0 0
        %1055 = vmatprep.subr.bf16.mxu0 0
        %1056 = vmatpush1.bf16.msra.mxu0 0
        %1057 = vmatprep.subr.bf16.mxu0 0
        %1058 = vmatpush1.bf16.msra.mxu0 0
        %1059 = vmatprep.subr.bf16.mxu0 0
        %1060 = vmatpush1.bf16.msra.mxu0 0
        %1061 = vmatprep.subr.bf16.mxu0 0
        %1062 = vmatpush1.bf16.msra.mxu0 0
        %1063 = vmatprep.subr.bf16.mxu0 0
        %1064 = vmatpush1.bf16.msra.mxu0 0
        %1065 = vmatprep.subr.bf16.mxu0 0
        %1066 = vmatpush1.bf16.msra.mxu0 0
        %1067 = vmatprep.mubr.bf16.mxu0 0
        %1068 = vmatmul.mubr.bf16.gmra.mrb[0].mxu0 %v954
        %v1069 = vpop.f32.mrb[0].mxu0
        %v1070 = vadd.f32 %v985, %v1069
        %v1071 = vpop.f32.mrb[0].mxu0
        %v1072 = vpop.f32.mrb[0].mxu0
        %v1073 = vadd.f32 %v985, %v1072
        %v1074 = vpop.f32.mrb[0].mxu0
        %1075 = vmatprep.mubr.bf16.mxu0 0
        %1076 = vmatmul.mubr.bf16.gmra.mrb[0].mxu0 %v955
        %v1077 = vpop.f32.mrb[0].mxu0
        %v1078 = vadd.f32 %v985, %v1077
        %v1079 = vpop.f32.mrb[0].mxu0
        %v1080 = vpop.f32.mrb[0].mxu0
        %v1081 = vadd.f32 %v985, %v1080
        %v1082 = vpop.f32.mrb[0].mxu0
        %1083 = vmatprep.mubr.bf16.mxu0 0
        %1084 = vmatmul.mubr.bf16.gmra.mrb[0].mxu0 %v956
        %v1085 = vpop.f32.mrb[0].mxu0
        %v1086 = vadd.f32 %v985, %v1085
        %v1087 = vpop.f32.mrb[0].mxu0
        %v1088 = vpop.f32.mrb[0].mxu0
        %v1089 = vadd.f32 %v985, %v1088
        %v1090 = vpop.f32.mrb[0].mxu0
        %1091 = vmatprep.mubr.bf16.mxu0 0
        %1092 = vmatmul.mubr.bf16.gmra.mrb[0].mxu0 %v957
        %v1093 = vpop.f32.mrb[0].mxu0
        %v1094 = vadd.f32 %v985, %v1093
        %v1095 = vpop.f32.mrb[0].mxu0
        %v1096 = vpop.f32.mrb[0].mxu0
        %v1097 = vadd.f32 %v985, %v1096
        %v1098 = vpop.f32.mrb[0].mxu0
        %1099 = vmatprep.mubr.bf16.mxu0 0
        %1100 = vmatmul.mubr.bf16.gmra.mrb[0].mxu0 %v958
        %v1101 = vpop.f32.mrb[0].mxu0
        %v1102 = vadd.f32 %v985, %v1101
        %v1103 = vpop.f32.mrb[0].mxu0
        %v1104 = vpop.f32.mrb[0].mxu0
        %v1105 = vadd.f32 %v985, %v1104
        %v1106 = vpop.f32.mrb[0].mxu0
        %1107 = vmatprep.mubr.bf16.mxu0 0
        %1108 = vmatmul.mubr.bf16.gmra.mrb[0].mxu0 %v959
        %v1109 = vpop.f32.mrb[0].mxu0
        %v1110 = vadd.f32 %v985, %v1109
        %v1111 = vpop.f32.mrb[0].mxu0
        %v1112 = vpop.f32.mrb[0].mxu0
        %v1113 = vadd.f32 %v985, %v1112
        %v1114 = vpop.f32.mrb[0].mxu0
        %1115 = vmatprep.mubr.bf16.mxu0 0
        %1116 = vmatmul.mubr.bf16.gmra.mrb[0].mxu0 %v960
        %v1117 = vpop.f32.mrb[0].mxu0
        %v1118 = vadd.f32 %v985, %v1117
        %v1119 = vpop.f32.mrb[0].mxu0
        %v1120 = vpop.f32.mrb[0].mxu0
        %v1121 = vadd.f32 %v985, %v1120
        %v1122 = vpop.f32.mrb[0].mxu0
        %1123 = vmatprep.mubr.bf16.mxu0 0
        %1124 = vmatmul.mubr.bf16.gmra.mrb[0].mxu0 %v961
        %v1125 = vpop.f32.mrb[0].mxu0
        %v1126 = vadd.f32 %v985, %v1125
        %v1127 = vpop.f32.mrb[0].mxu0
        %v1128 = vpop.f32.mrb[0].mxu0
        %v1129 = vadd.f32 %v985, %v1128
        %v1130 = vpop.f32.mrb[0].mxu0
        %1131 = vdwg.mxu0
        %v1132 = vmax.f32 %v1070, 0.0
        %v1133 = vmax.f32 %v1073, 0.0
        %v1134 = vmax.f32 %v1078, 0.0
        %v1135 = vmax.f32 %v1081, 0.0
        %v1136 = vmax.f32 %v1086, 0.0
        %v1137 = vmax.f32 %v1089, 0.0
        %v1138 = vmax.f32 %v1094, 0.0
        %v1139 = vmax.f32 %v1097, 0.0
        %v1140 = vmax.f32 %v1102, 0.0
        %v1141 = vmax.f32 %v1105, 0.0
        %v1142 = vmax.f32 %v1110, 0.0
        %v1143 = vmax.f32 %v1113, 0.0
        %v1144 = vmax.f32 %v1118, 0.0
        %v1145 = vmax.f32 %v1121, 0.0
        %v1146 = vmax.f32 %v1126, 0.0
        %v1147 = vmax.f32 %v1129, 0.0
        %v1148 = vpack.c.bf16 %v1133, %v1132
        %v1149 = vpack.c.bf16 %v1135, %v1134
        %v1150 = vpack.c.bf16 %v1137, %v1136
        %v1151 = vpack.c.bf16 %v1139, %v1138
        %v1152 = vpack.c.bf16 %v1141, %v1140
        %v1153 = vpack.c.bf16 %v1143, %v1142
        %v1154 = vpack.c.bf16 %v1145, %v1144
        %v1155 = vpack.c.bf16 %v1147, %v1146
        %s1156 = scalar_lea.vmem [#allocation7], 192
        %v1157 = vld [vmem:[%s1156] sm:$0xf]
        %v1158 = vld [vmem:[%s1156 + $0x4] sm:$0xf]
        %v1159 = vld [vmem:[%s1156 + $0x8] sm:$0xf]
        %v1160 = vld [vmem:[%s1156 + $0xc] sm:$0xf]
        %v1161 = vld [vmem:[%s1156 + $0x10] sm:$0xf]
        %v1162 = vld [vmem:[%s1156 + $0x14] sm:$0xf]
        %v1163 = vld [vmem:[%s1156 + $0x18] sm:$0xf]
        %v1164 = vld [vmem:[%s1156 + $0x1c] sm:$0xf]
        %v1165 = vld [vmem:[%s1156 + $0x20] sm:$0xf]
        %v1166 = vld [vmem:[%s1156 + $0x24] sm:$0xf]
        %v1167 = vld [vmem:[%s1156 + $0x28] sm:$0xf]
        %v1168 = vld [vmem:[%s1156 + $0x2c] sm:$0xf]
        %v1169 = vld [vmem:[%s1156 + $0x30] sm:$0xf]
        %v1170 = vld [vmem:[%s1156 + $0x34] sm:$0xf]
        %v1171 = vld [vmem:[%s1156 + $0x38] sm:$0xf]
        %v1172 = vld [vmem:[%s1156 + $0x3c] sm:$0xf]
        %s1173 = scalar_lea.vmem %s4, 3
        %v1174 = vld [vmem:[%s1173] sm:$0x1]
        %v1176 = vlaneseq
        %v1177 = vshrl.u32 %v1176, 7
        %v1178 = vsub.s32 0, %v1177
        %v1179 = vrot.slane %v1174, %v1178
        %v1197 = vunpack.c.l.b16 %v1157
        %v1198 = vunpack.c.l.b16 %v1158
        %v1199 = vunpack.c.l.b16 %v1159
        %v1200 = vunpack.c.l.b16 %v1160
        %v1201 = vunpack.c.l.b16 %v1161
        %v1202 = vunpack.c.l.b16 %v1162
        %v1203 = vunpack.c.l.b16 %v1163
        %v1204 = vunpack.c.l.b16 %v1164
        %v1205 = vunpack.c.l.b16 %v1165
        %v1206 = vunpack.c.l.b16 %v1166
        %v1207 = vunpack.c.l.b16 %v1167
        %v1208 = vunpack.c.l.b16 %v1168
        %v1209 = vunpack.c.l.b16 %v1169
        %v1210 = vunpack.c.l.b16 %v1170
        %v1211 = vunpack.c.l.b16 %v1171
        %v1212 = vunpack.c.l.b16 %v1172
        %v1213 = vpack.c.b16 %v1198, %v1197
        %v1214 = vpack.c.b16 %v1200, %v1199
        %v1215 = vpack.c.b16 %v1202, %v1201
        %v1216 = vpack.c.b16 %v1204, %v1203
        %v1217 = vpack.c.b16 %v1206, %v1205
        %v1218 = vpack.c.b16 %v1208, %v1207
        %v1219 = vpack.c.b16 %v1210, %v1209
        %v1220 = vpack.c.b16 %v1212, %v1211
        %1229 = vmatprep.subr.bf16.mxu0 0
        %1230 = vmatpush1.bf16.msra.mxu0 %v1213
        %1231 = vmatprep.subr.bf16.mxu0 0
        %1232 = vmatpush1.bf16.msra.mxu0 %v1214
        %1233 = vmatprep.subr.bf16.mxu0 0
        %1234 = vmatpush1.bf16.msra.mxu0 %v1215
        %1235 = vmatprep.subr.bf16.mxu0 0
        %1236 = vmatpush1.bf16.msra.mxu0 %v1216
        %1237 = vmatprep.subr.bf16.mxu0 0
        %1238 = vmatpush1.bf16.msra.mxu0 %v1217
        %1239 = vmatprep.subr.bf16.mxu0 0
        %1240 = vmatpush1.bf16.msra.mxu0 %v1218
        %1241 = vmatprep.subr.bf16.mxu0 0
        %1242 = vmatpush1.bf16.msra.mxu0 %v1219
        %1243 = vmatprep.subr.bf16.mxu0 0
        %1244 = vmatpush1.bf16.msra.mxu0 %v1220
        %1245 = vmatprep.subr.bf16.mxu0 0
        %1246 = vmatpush1.bf16.msra.mxu0 0
        %1247 = vmatprep.subr.bf16.mxu0 0
        %1248 = vmatpush1.bf16.msra.mxu0 0
        %1249 = vmatprep.subr.bf16.mxu0 0
        %1250 = vmatpush1.bf16.msra.mxu0 0
        %1251 = vmatprep.subr.bf16.mxu0 0
        %1252 = vmatpush1.bf16.msra.mxu0 0
        %1253 = vmatprep.subr.bf16.mxu0 0
        %1254 = vmatpush1.bf16.msra.mxu0 0
        %1255 = vmatprep.subr.bf16.mxu0 0
        %1256 = vmatpush1.bf16.msra.mxu0 0
        %1257 = vmatprep.subr.bf16.mxu0 0
        %1258 = vmatpush1.bf16.msra.mxu0 0
        %1259 = vmatprep.subr.bf16.mxu0 0
        %1260 = vmatpush1.bf16.msra.mxu0 0
        %1261 = vmatprep.mubr.bf16.mxu0 0
        %1262 = vmatmul.mubr.bf16.gmra.mrb[0].mxu0 %v1148
        %v1263 = vpop.f32.mrb[0].mxu0
        %v1264 = vadd.f32 %v1179, %v1263
        %v1265 = vpop.f32.mrb[0].mxu0
        %v1266 = vpop.f32.mrb[0].mxu0
        %v1267 = vadd.f32 %v1179, %v1266
        %v1268 = vpop.f32.mrb[0].mxu0
        %1269 = vmatprep.mubr.bf16.mxu0 0
        %1270 = vmatmul.mubr.bf16.gmra.mrb[0].mxu0 %v1149
        %v1271 = vpop.f32.mrb[0].mxu0
        %v1272 = vadd.f32 %v1179, %v1271
        %v1273 = vpop.f32.mrb[0].mxu0
        %v1274 = vpop.f32.mrb[0].mxu0
        %v1275 = vadd.f32 %v1179, %v1274
        %v1276 = vpop.f32.mrb[0].mxu0
        %1277 = vmatprep.mubr.bf16.mxu0 0
        %1278 = vmatmul.mubr.bf16.gmra.mrb[0].mxu0 %v1150
        %v1279 = vpop.f32.mrb[0].mxu0
        %v1280 = vadd.f32 %v1179, %v1279
        %v1281 = vpop.f32.mrb[0].mxu0
        %v1282 = vpop.f32.mrb[0].mxu0
        %v1283 = vadd.f32 %v1179, %v1282
        %v1284 = vpop.f32.mrb[0].mxu0
        %1285 = vmatprep.mubr.bf16.mxu0 0
        %1286 = vmatmul.mubr.bf16.gmra.mrb[0].mxu0 %v1151
        %v1287 = vpop.f32.mrb[0].mxu0
        %v1288 = vadd.f32 %v1179, %v1287
        %v1289 = vpop.f32.mrb[0].mxu0
        %v1290 = vpop.f32.mrb[0].mxu0
        %v1291 = vadd.f32 %v1179, %v1290
        %v1292 = vpop.f32.mrb[0].mxu0
        %1293 = vmatprep.mubr.bf16.mxu0 0
        %1294 = vmatmul.mubr.bf16.gmra.mrb[0].mxu0 %v1152
        %v1295 = vpop.f32.mrb[0].mxu0
        %v1296 = vadd.f32 %v1179, %v1295
        %v1297 = vpop.f32.mrb[0].mxu0
        %v1298 = vpop.f32.mrb[0].mxu0
        %v1299 = vadd.f32 %v1179, %v1298
        %v1300 = vpop.f32.mrb[0].mxu0
        %1301 = vmatprep.mubr.bf16.mxu0 0
        %1302 = vmatmul.mubr.bf16.gmra.mrb[0].mxu0 %v1153
        %v1303 = vpop.f32.mrb[0].mxu0
        %v1304 = vadd.f32 %v1179, %v1303
        %v1305 = vpop.f32.mrb[0].mxu0
        %v1306 = vpop.f32.mrb[0].mxu0
        %v1307 = vadd.f32 %v1179, %v1306
        %v1308 = vpop.f32.mrb[0].mxu0
        %1309 = vmatprep.mubr.bf16.mxu0 0
        %1310 = vmatmul.mubr.bf16.gmra.mrb[0].mxu0 %v1154
        %v1311 = vpop.f32.mrb[0].mxu0
        %v1312 = vadd.f32 %v1179, %v1311
        %v1313 = vpop.f32.mrb[0].mxu0
        %v1314 = vpop.f32.mrb[0].mxu0
        %v1315 = vadd.f32 %v1179, %v1314
        %v1316 = vpop.f32.mrb[0].mxu0
        %1317 = vmatprep.mubr.bf16.mxu0 0
        %1318 = vmatmul.mubr.bf16.gmra.mrb[0].mxu0 %v1155
        %v1319 = vpop.f32.mrb[0].mxu0
        %v1320 = vadd.f32 %v1179, %v1319
        %v1321 = vpop.f32.mrb[0].mxu0
        %v1322 = vpop.f32.mrb[0].mxu0
        %v1323 = vadd.f32 %v1179, %v1322
        %v1324 = vpop.f32.mrb[0].mxu0
        %1325 = vdwg.mxu0
        %v1326 = vadd.f32 %v922, %v1264
        %v1327 = vadd.f32 %v923, %v1267
        %v1328 = vadd.f32 %v924, %v1272
        %v1329 = vadd.f32 %v925, %v1275
        %v1330 = vadd.f32 %v926, %v1280
        %v1331 = vadd.f32 %v927, %v1283
        %v1332 = vadd.f32 %v928, %v1288
        %v1333 = vadd.f32 %v929, %v1291
        %v1334 = vadd.f32 %v930, %v1296
        %v1335 = vadd.f32 %v931, %v1299
        %v1336 = vadd.f32 %v932, %v1304
        %v1337 = vadd.f32 %v933, %v1307
        %v1338 = vadd.f32 %v934, %v1312
        %v1339 = vadd.f32 %v935, %v1315
        %v1340 = vadd.f32 %v936, %v1320
        %v1341 = vadd.f32 %v937, %v1323
        %v1342 = vpack.c.bf16 %v1327, %v1326
        %v1343 = vpack.c.bf16 %v1329, %v1328
        %v1344 = vpack.c.bf16 %v1331, %v1330
        %v1345 = vpack.c.bf16 %v1333, %v1332
        %v1346 = vpack.c.bf16 %v1335, %v1334
        %v1347 = vpack.c.bf16 %v1337, %v1336
        %v1348 = vpack.c.bf16 %v1339, %v1338
        %v1349 = vpack.c.bf16 %v1341, %v1340
        %v1350 = vld [vmem:[#allocation8] sm:$0xf]
        %v1351 = vld [vmem:[#allocation8 + $0x4] sm:$0xf]
        %v1352 = vld [vmem:[#allocation8 + $0x8] sm:$0xf]
        %v1353 = vld [vmem:[#allocation8 + $0xc] sm:$0xf]
        %v1354 = vld [vmem:[#allocation8 + $0x10] sm:$0xf]
        %v1355 = vld [vmem:[#allocation8 + $0x14] sm:$0xf]
        %v1356 = vld [vmem:[#allocation8 + $0x18] sm:$0xf]
        %v1357 = vld [vmem:[#allocation8 + $0x1c] sm:$0xf]
        %v1358 = vld [vmem:[#allocation8 + $0x20] sm:$0xf]
        %v1359 = vld [vmem:[#allocation8 + $0x24] sm:$0xf]
        %v1360 = vld [vmem:[#allocation8 + $0x28] sm:$0xf]
        %v1361 = vld [vmem:[#allocation8 + $0x2c] sm:$0xf]
        %v1362 = vld [vmem:[#allocation8 + $0x30] sm:$0xf]
        %v1363 = vld [vmem:[#allocation8 + $0x34] sm:$0xf]
        %v1364 = vld [vmem:[#allocation8 + $0x38] sm:$0xf]
        %v1365 = vld [vmem:[#allocation8 + $0x3c] sm:$0xf]
        %v1366 = vld [vmem:[%s6] sm:$0x1]
        %v1368 = vlaneseq
        %v1369 = vshrl.u32 %v1368, 7
        %v1370 = vsub.s32 0, %v1369
        %v1371 = vrot.slane %v1366, %v1370
        %v1389 = vunpack.c.l.b16 %v1350
        %v1390 = vunpack.c.l.b16 %v1351
        %v1391 = vunpack.c.l.b16 %v1352
        %v1392 = vunpack.c.l.b16 %v1353
        %v1393 = vunpack.c.l.b16 %v1354
        %v1394 = vunpack.c.l.b16 %v1355
        %v1395 = vunpack.c.l.b16 %v1356
        %v1396 = vunpack.c.l.b16 %v1357
        %v1397 = vunpack.c.l.b16 %v1358
        %v1398 = vunpack.c.l.b16 %v1359
        %v1399 = vunpack.c.l.b16 %v1360
        %v1400 = vunpack.c.l.b16 %v1361
        %v1401 = vunpack.c.l.b16 %v1362
        %v1402 = vunpack.c.l.b16 %v1363
        %v1403 = vunpack.c.l.b16 %v1364
        %v1404 = vunpack.c.l.b16 %v1365
        %v1405 = vpack.c.b16 %v1390, %v1389
        %v1406 = vpack.c.b16 %v1392, %v1391
        %v1407 = vpack.c.b16 %v1394, %v1393
        %v1408 = vpack.c.b16 %v1396, %v1395
        %v1409 = vpack.c.b16 %v1398, %v1397
        %v1410 = vpack.c.b16 %v1400, %v1399
        %v1411 = vpack.c.b16 %v1402, %v1401
        %v1412 = vpack.c.b16 %v1404, %v1403
        %1421 = vmatprep.subr.bf16.mxu0 0
        %1422 = vmatpush1.bf16.msra.mxu0 %v1405
        %1423 = vmatprep.subr.bf16.mxu0 0
        %1424 = vmatpush1.bf16.msra.mxu0 %v1406
        %1425 = vmatprep.subr.bf16.mxu0 0
        %1426 = vmatpush1.bf16.msra.mxu0 %v1407
        %1427 = vmatprep.subr.bf16.mxu0 0
        %1428 = vmatpush1.bf16.msra.mxu0 %v1408
        %1429 = vmatprep.subr.bf16.mxu0 0
        %1430 = vmatpush1.bf16.msra.mxu0 %v1409
        %1431 = vmatprep.subr.bf16.mxu0 0
        %1432 = vmatpush1.bf16.msra.mxu0 %v1410
        %1433 = vmatprep.subr.bf16.mxu0 0
        %1434 = vmatpush1.bf16.msra.mxu0 %v1411
        %1435 = vmatprep.subr.bf16.mxu0 0
        %1436 = vmatpush1.bf16.msra.mxu0 %v1412
        %1437 = vmatprep.subr.bf16.mxu0 0
        %1438 = vmatpush1.bf16.msra.mxu0 0
        %1439 = vmatprep.subr.bf16.mxu0 0
        %1440 = vmatpush1.bf16.msra.mxu0 0
        %1441 = vmatprep.subr.bf16.mxu0 0
        %1442 = vmatpush1.bf16.msra.mxu0 0
        %1443 = vmatprep.subr.bf16.mxu0 0
        %1444 = vmatpush1.bf16.msra.mxu0 0
        %1445 = vmatprep.subr.bf16.mxu0 0
        %1446 = vmatpush1.bf16.msra.mxu0 0
        %1447 = vmatprep.subr.bf16.mxu0 0
        %1448 = vmatpush1.bf16.msra.mxu0 0
        %1449 = vmatprep.subr.bf16.mxu0 0
        %1450 = vmatpush1.bf16.msra.mxu0 0
        %1451 = vmatprep.subr.bf16.mxu0 0
        %1452 = vmatpush1.bf16.msra.mxu0 0
        %1453 = vmatprep.mubr.bf16.mxu0 0
        %1454 = vmatmul.mubr.bf16.gmra.mrb[0].mxu0 %v1342
        %v1455 = vpop.f32.mrb[0].mxu0
        %v1456 = vadd.f32 %v1371, %v1455
        %v1457 = vpop.f32.mrb[0].mxu0
        %v1458 = vpop.f32.mrb[0].mxu0
        %v1459 = vadd.f32 %v1371, %v1458
        %v1460 = vpop.f32.mrb[0].mxu0
        %1461 = vmatprep.mubr.bf16.mxu0 0
        %1462 = vmatmul.mubr.bf16.gmra.mrb[0].mxu0 %v1343
        %v1463 = vpop.f32.mrb[0].mxu0
        %v1464 = vadd.f32 %v1371, %v1463
        %v1465 = vpop.f32.mrb[0].mxu0
        %v1466 = vpop.f32.mrb[0].mxu0
        %v1467 = vadd.f32 %v1371, %v1466
        %v1468 = vpop.f32.mrb[0].mxu0
        %1469 = vmatprep.mubr.bf16.mxu0 0
        %1470 = vmatmul.mubr.bf16.gmra.mrb[0].mxu0 %v1344
        %v1471 = vpop.f32.mrb[0].mxu0
        %v1472 = vadd.f32 %v1371, %v1471
        %v1473 = vpop.f32.mrb[0].mxu0
        %v1474 = vpop.f32.mrb[0].mxu0
        %v1475 = vadd.f32 %v1371, %v1474
        %v1476 = vpop.f32.mrb[0].mxu0
        %1477 = vmatprep.mubr.bf16.mxu0 0
        %1478 = vmatmul.mubr.bf16.gmra.mrb[0].mxu0 %v1345
        %v1479 = vpop.f32.mrb[0].mxu0
        %v1480 = vadd.f32 %v1371, %v1479
        %v1481 = vpop.f32.mrb[0].mxu0
        %v1482 = vpop.f32.mrb[0].mxu0
        %v1483 = vadd.f32 %v1371, %v1482
        %v1484 = vpop.f32.mrb[0].mxu0
        %1485 = vmatprep.mubr.bf16.mxu0 0
        %1486 = vmatmul.mubr.bf16.gmra.mrb[0].mxu0 %v1346
        %v1487 = vpop.f32.mrb[0].mxu0
        %v1488 = vadd.f32 %v1371, %v1487
        %v1489 = vpop.f32.mrb[0].mxu0
        %v1490 = vpop.f32.mrb[0].mxu0
        %v1491 = vadd.f32 %v1371, %v1490
        %v1492 = vpop.f32.mrb[0].mxu0
        %1493 = vmatprep.mubr.bf16.mxu0 0
        %1494 = vmatmul.mubr.bf16.gmra.mrb[0].mxu0 %v1347
        %v1495 = vpop.f32.mrb[0].mxu0
        %v1496 = vadd.f32 %v1371, %v1495
        %v1497 = vpop.f32.mrb[0].mxu0
        %v1498 = vpop.f32.mrb[0].mxu0
        %v1499 = vadd.f32 %v1371, %v1498
        %v1500 = vpop.f32.mrb[0].mxu0
        %1501 = vmatprep.mubr.bf16.mxu0 0
        %1502 = vmatmul.mubr.bf16.gmra.mrb[0].mxu0 %v1348
        %v1503 = vpop.f32.mrb[0].mxu0
        %v1504 = vadd.f32 %v1371, %v1503
        %v1505 = vpop.f32.mrb[0].mxu0
        %v1506 = vpop.f32.mrb[0].mxu0
        %v1507 = vadd.f32 %v1371, %v1506
        %v1508 = vpop.f32.mrb[0].mxu0
        %1509 = vmatprep.mubr.bf16.mxu0 0
        %1510 = vmatmul.mubr.bf16.gmra.mrb[0].mxu0 %v1349
        %v1511 = vpop.f32.mrb[0].mxu0
        %v1512 = vadd.f32 %v1371, %v1511
        %v1513 = vpop.f32.mrb[0].mxu0
        %v1514 = vpop.f32.mrb[0].mxu0
        %v1515 = vadd.f32 %v1371, %v1514
        %v1516 = vpop.f32.mrb[0].mxu0
        %1517 = vdwg.mxu0
        %1518 = vst [vmem:[%s340] sm:$0xff] %v1456
        %1519 = vst [vmem:[%s340 + $0x8] sm:$0xff] %v1459
        %1520 = vst [vmem:[%s340 + $0x10] sm:$0xff] %v1464
        %1521 = vst [vmem:[%s340 + $0x18] sm:$0xff] %v1467
        %1522 = vst [vmem:[%s340 + $0x20] sm:$0xff] %v1472
        %1523 = vst [vmem:[%s340 + $0x28] sm:$0xff] %v1475
        %1524 = vst [vmem:[%s340 + $0x30] sm:$0xff] %v1480
        %1525 = vst [vmem:[%s340 + $0x38] sm:$0xff] %v1483
        %1526 = vst [vmem:[%s340 + $0x40] sm:$0xff] %v1488
        %1527 = vst [vmem:[%s340 + $0x48] sm:$0xff] %v1491
        %1528 = vst [vmem:[%s340 + $0x50] sm:$0xff] %v1496
        %1529 = vst [vmem:[%s340 + $0x58] sm:$0xff] %v1499
        %1530 = vst [vmem:[%s340 + $0x60] sm:$0xff] %v1504
        %1531 = vst [vmem:[%s340 + $0x68] sm:$0xff] %v1507
        %1532 = vst [vmem:[%s340 + $0x70] sm:$0xff] %v1512
        %1533 = vst [vmem:[%s340 + $0x78] sm:$0xff] %v1515
        %s1534 = sand.u32 %s186, 1
        %s1535 = scalar_lea.sflag [#allocation4], %s1534
        %s1536 = sand.u32 %s186, 1
        %s1537 = smul.addr %s1536, 128
        %s1538 = scalar_lea.vmem [#allocation10], %s1537
        // Predicated region
        $region65: #{tpu_custom_call.1} parent=47 // pred_check
          %p1539 = pneg %p196
        $region66: #{tpu_custom_call.1} parent=47 // pred_check_branch
          %1541 = sbr.rel (%p1539) target = $region68
        $region67: #{tpu_custom_call.1} parent=47 // pred_region
          %s1542 = smul.u32 16, %s26
          %s1544 = ssub.s32 2048, 2048
          %1545 = vsyncadd %s1535, %s1544
          %s1546 = smul.addr %s1542, 128
          %s1547 = scalar_lea.hbm %s7, %s1546
          %s1548 = sshll.u32 %s1538, 4
          %s1549 = int_to_ptr.vmem [resolvable:$true] %s1548
          %1554 = dma.vmem_to_hbm [thread:$0]  %s1549, 2048, %s1547, %s1535, 128, 128, 8
        $region68: #{tpu_custom_call.1} parent=47 // pred_fallthru
          _
      $region48: #{tpu_custom_call.1} parent=5 // pred_fallthru
        _
      %p1555 = scmp.le.s32.totalorder 2, %s21
      // Predicated region
      $region69: #{tpu_custom_call.1} parent=5 // pred_check
        %p1556 = pneg %p1555
      $region70: #{tpu_custom_call.1} parent=5 // pred_check_branch
        %1558 = sbr.rel (%p1556) target = $region72
      $region71: #{tpu_custom_call.1} parent=5 // pred_region
        %s1559 = ssub.s32 %s21, 2
        // Predicated region
        $region73: #{tpu_custom_call.1} parent=71 // pred_check
          %p1560 = pneg %p202
        $region74: #{tpu_custom_call.1} parent=71 // pred_check_branch
          %1562 = sbr.rel (%p1560) target = $region76
        $region75: #{tpu_custom_call.1} parent=71 // pred_region
          %s1563 = sand.u32 %s187, 1
          %s1564 = scalar_lea.sflag [#allocation4], %s1563
          %s1565 = sand.u32 %s187, 1
          %s1566 = smul.addr %s1565, 128
          %s1567 = scalar_lea.vmem [#allocation10], %s1566
          %1568 = dma.done %s1564, 2048
        $region76: #{tpu_custom_call.1} parent=71 // pred_fallthru
          _
      $region72: #{tpu_custom_call.1} parent=5 // pred_fallthru
        _
    $region6: #{tpu_custom_call.1} parent=1 // loop_footer
      %s25 = sadd.s32 1, %s21
    $region7: #{tpu_custom_call.1} parent=1 // loop_footer_branch
      %20 = sbr.rel target = $region3
    $region8: #{tpu_custom_call.1} parent=1 // loop_exit
      _
    %1569 = vsyncpa [#allocation3], 1
    %s1570 = scalar_lea.sflag [#allocation3], 1
    %1571 = vsyncpa %s1570, 1
    %1572 = vsyncpa [#allocation6], 1
    %1573 = vsyncpa [#allocation9], 1
    %1574 = vsyncpa [#allocation4], 1
    %s1575 = scalar_lea.sflag [#allocation4], 1
    %1576 = vsyncpa %s1575, 1

</llo_original>
